<compile_context>
chip_gen: v5e
topology: v5e:2x2
jax: 0.10.0
libtpu: 0.0.40
codegen_flags: <defaults>
</compile_context>

<pallas_src>
import functools

import jax
import jax.numpy as jnp
from jax import lax
from jax.experimental import pallas as pl
from jax.experimental.pallas import tpu as pltpu

EMBED_LEN = 50    # self.embed_len
HIDDEN_DIM = 75   # self.hidden_dim


def _round_up(x, m):
    return (x + m - 1) // m * m


def _default_compute_dtype():
    """bf16 add/tanh/select on bf16-VPU/EUP chips (v6e/v7x); f32 otherwise."""
    try:
        kind = jax.devices()[0].device_kind.lower()
    except Exception:
        return jnp.float32
    if any(v in kind for v in ("v2", "v3", "v4", "v5")):
        return jnp.float32
    return jnp.bfloat16


def _birnn_kernel(xe_ref, len_ref, wih_ref, bih_ref, whh_ref, wout_ref,
                  bout_ref, out_ref, *, L, Hp, cdt):
    """Fused bidirectional recurrence + output projection, all in VMEM.

    xe_ref   : (L*Bp, Ep)  bf16  time-major embeddings, batch/lane zero-padded
    len_ref  : (Bp, 1)     i32   valid lengths (0 for padded batch rows)
    wih_ref  : (Ep, 2Hp)   bf16  packed [wih_f | wih_b] input weights
    bih_ref  : (1, 2Hp)    f32   fused b_ih + b_hh for both directions
    whh_ref  : (2Hp, 2Hp)  bf16  zero-padded block-diagonal recurrent weights
    wout_ref : (2Hp, Cp)   bf16  output projection over [h_fwd | h_bwd]
    bout_ref : (1, Cp)     f32
    out_ref  : (Bp, Cp)    f32   lane-dense logits (sliced in the wrapper)
    """
    Bp = out_ref.shape[0]
    H2 = 2 * Hp

    # ---- Phase 1 (hoisted): input projection for BOTH directions and EVERY
    # timestep as one bf16 MXU matmul over L*Bp rows; biases folded in here.
    # Kept in vregs (no VMEM scratch round-trip) since L is small and static.
    xproj = (jnp.dot(xe_ref[...], wih_ref[...],
                     preferred_element_type=jnp.float32)
             + bih_ref[...]).astype(cdt).reshape(L, Bp, H2)

    # ---- Hoisted, loop-invariant packed-sequence masking bounds:
    # lane (b, j) is updated at step t iff t_lo <= t < t_hi.
    #   fwd half: update while t < len[b]          -> [0, len)
    #   bwd half: update while (L-1-t) < len[b]    -> [L-len, L)
    lens = jnp.broadcast_to(len_ref[...], (Bp, H2))
    is_fwd = lax.broadcasted_iota(jnp.int32, (Bp, H2), 1) < Hp
    t_lo = jnp.where(is_fwd, 0, L - lens)
    t_hi = jnp.where(is_fwd, lens, L)
    # t is a trace-time constant below, so these compares never touch the serial
    # h chain; precompute them ahead of the loop.
    upd = [(t >= t_lo) & (t < t_hi) for t in range(L)]

    # ---- Phase 2: fused recurrence, fully unrolled with concrete t.
    # One (Bp,2Hp)@(2Hp,2Hp) block-diagonal bf16 matmul per step, f32 acc;
    # add/tanh/select in `cdt` (bf16 on v6e/v7x, f32 on v5e).
    h = jnp.zeros((Bp, H2), cdt)
    for t in range(L):
        # Step input: fwd half from time t, bwd half from time L-1-t
        # (static, lane-aligned slices of the hoisted projection).
        inp_t = jnp.concatenate(
            [xproj[t, :, :Hp], xproj[L - 1 - t, :, Hp:]], axis=-1)
        acc = jnp.dot(h.astype(whh_ref.dtype), whh_ref[...],
                      preferred_element_type=jnp.float32)
        h_new = jnp.tanh(inp_t + acc.astype(cdt))
        h = jnp.where(upd[t], h_new, h)

    # ---- Phase 3: output projection over the fused [h_fwd_last | h_bwd_first]
    # state; bf16 operands, f32 acc, lane-dense (Cp = multiple of 128) store.
    out_ref[...] = (jnp.dot(h.astype(wout_ref.dtype), wout_ref[...],
                            preferred_element_type=jnp.float32)
                    + bout_ref[...])


def rnn_forward(packed, inputs, inputs_len):
    """inputs: (B, L) int32 token ids; inputs_len: (B,) int32 -> (B, C) logits."""
    B, L = inputs.shape
    E, Ep, Hp = packed["E"], packed["Ep"], packed["Hp"]
    C, Cp = packed["C"], packed["Cp"]
    Bp = _round_up(B, 8)          # sublane-aligned batch

    # Glue: embedding gather, time-major layout, batch/lane zero-padding.
    # (At production sizes this gather/pad should be fused into the kernel via
    # scalar-prefetched ids + an HBM-resident table; see NOTE at top.)
    emb = packed["embedding"][inputs].astype(jnp.float32)         # (B, L, E)
    xe = jnp.transpose(emb, (1, 0, 2))                             # (L, B, E)
    xe = jnp.pad(xe, ((0, 0), (0, Bp - B), (0, Ep - E)))           # (L, Bp, Ep)
    xe = xe.reshape(L * Bp, Ep).astype(jnp.bfloat16)

    lens = jnp.pad(inputs_len.astype(jnp.int32), (0, Bp - B)).reshape(Bp, 1)

    vmem = pl.BlockSpec(memory_space=pltpu.MemorySpace.VMEM)
    kernel = functools.partial(_birnn_kernel, L=L, Hp=Hp, cdt=packed["cdt"])
    out = pl.pallas_call(
        kernel,
        out_shape=jax.ShapeDtypeStruct((Bp, Cp), jnp.float32),
        in_specs=[vmem] * 7,
        out_specs=vmem,
    )(xe, lens, packed["wih"], packed["bih"], packed["whh"],
      packed["wout"], packed["bout"])
    return out[:B, :C]


def rnn_reference(raw, inputs, inputs_len):
    """Pure-JAX f32 reference of the same model math (packed-seq semantics)."""
    emb = raw["embedding"][inputs].astype(jnp.float32)
    xe = jnp.transpose(emb, (1, 0, 2))
    B, L = inputs.shape
    H = raw["whh_f"].shape[0]
    lens = inputs_len.astype(jnp.int32)[:, None]
    h_f = jnp.zeros((B, H), jnp.float32)
    h_b = jnp.zeros((B, H), jnp.float32)
    for t in range(L):
        hf_new = jnp.tanh(xe[t] @ raw["wih_f"] + h_f @ raw["whh_f"] + raw["b_f"])
        hb_new = jnp.tanh(xe[L - 1 - t] @ raw["wih_b"] + h_b @ raw["whh_b"] + raw["b_b"])
        h_f = jnp.where(t < lens, hf_new, h_f)
        h_b = jnp.where((L - 1 - t) < lens, hb_new, h_b)
    return h_f @ raw["wout_f"] + h_b @ raw["wout_b"] + raw["bout"]


def init_raw_params(key, vocab_size, num_classes):
    """Logical (un-padded, f32) parameters mirroring the PyTorch module."""
    E, H, C = EMBED_LEN, HIDDEN_DIM, num_classes
    ks = jax.random.split(key, 12)
    k = 1.0 / jnp.sqrt(jnp.float32(H))

    def u(kk, shape):
        return jax.random.uniform(kk, shape, jnp.float32, -k, k)

    return {
        "embedding": jax.random.normal(ks[0], (vocab_size, E), jnp.float32),
        # forward direction, stored transposed (in, out); b_ih + b_hh fused
        "wih_f": u(ks[1], (E, H)),
        "whh_f": u(ks[2], (H, H)),
        "b_f": u(ks[3], (1, H)) + u(ks[4], (1, H)),
        # backward direction
        "wih_b": u(ks[5], (E, H)),
        "whh_b": u(ks[6], (H, H)),
        "b_b": u(ks[7], (1, H)) + u(ks[8], (1, H)),
        # linear over concat([h_fwd_last, h_bwd_first]), split into (H, C) halves
        "wout_f": u(ks[9], (H, C)),
        "wout_b": u(ks[10], (H, C)),
        "bout": u(ks[11], (1, C)),
    }


def pack_params(raw, compute_dtype=None):
    """Pad/fuse the logical weights into the hardware-aligned kernel layout."""
    E, H = raw["wih_f"].shape
    C = raw["bout"].shape[-1]
    Hp = _round_up(H, 128)      # 75 -> 128 lanes per direction (2Hp = 256)
    Ep = _round_up(E, 64)       # 50 -> 64 contraction rows for the input proj
    Cp = _round_up(C, 128)      # 5  -> 128 lane-dense class dimension

    # Packed input weights: embeddings are fed ONCE, projected for both
    # directions at the same time index; the kernel handles the time reversal.
    wih = jnp.zeros((Ep, 2 * Hp), jnp.float32)
    wih = wih.at[:E, :H].set(raw["wih_f"]).at[:E, Hp:Hp + H].set(raw["wih_b"])

    bih = jnp.zeros((1, 2 * Hp), jnp.float32)
    bih = bih.at[:, :H].set(raw["b_f"]).at[:, Hp:Hp + H].set(raw["b_b"])

    whh = jnp.zeros((2 * Hp, 2 * Hp), jnp.float32)
    whh = whh.at[:H, :H].set(raw["whh_f"]).at[Hp:Hp + H, Hp:Hp + H].set(raw["whh_b"])

    wout = jnp.zeros((2 * Hp, Cp), jnp.float32)
    wout = wout.at[:H, :C].set(raw["wout_f"]).at[Hp:Hp + H, :C].set(raw["wout_b"])

    bout = jnp.zeros((1, Cp), jnp.float32).at[:, :C].set(raw["bout"])

    if compute_dtype is None:
        compute_dtype = _default_compute_dtype()

    return {
        "embedding": raw["embedding"],
        "wih": wih.astype(jnp.bfloat16),    # bf16 MXU operands; zero pad exact
        "bih": bih,
        "whh": whh.astype(jnp.bfloat16),
        "wout": wout.astype(jnp.bfloat16),
        "bout": bout,
        "E": E, "Ep": Ep, "Hp": Hp, "C": C, "Cp": Cp,
        "cdt": compute_dtype,
    }


if __name__ == "__main__":
    key = jax.random.PRNGKey(0)
    kp, ki = jax.random.split(key)

    vocab_size, num_classes = 100, 5
    B, L = 4, 12

    raw = init_raw_params(kp, vocab_size, num_classes)
    packed = pack_params(raw)

    inputs = jax.random.randint(ki, (B, L), 0, vocab_size, dtype=jnp.int32)
    inputs_len = jnp.array([12, 7, 5, 9], dtype=jnp.int32)  # lengths before padding

    out = rnn_forward(packed, inputs, inputs_len)
    out = jax.block_until_ready(out)

    ref = rnn_reference(raw, inputs, inputs_len)
    assert out.shape == (B, num_classes), out.shape
    # Tolerance covers bf16 MXU operands everywhere plus (on v6e/v7x) a bf16
    # add/tanh/select serial path; the tanh-bounded recurrence keeps the drift
    # at the few-percent level at this L.
    max_err = float(jnp.max(jnp.abs(out - ref)))
    assert jnp.allclose(out, ref, atol=7e-2, rtol=5e-2), max_err
    print("KERNEL_OK")
</pallas_src>

<mosaic_0001>
module attributes {stable_mosaic.version = 11 : i64} {
  func.func @_birnn_kernel(%arg0: memref<96x64xbf16, #tpu.memory_space<vmem>>, %arg1: memref<8x1xi32, #tpu.memory_space<vmem>>, %arg2: memref<64x256xbf16, #tpu.memory_space<vmem>>, %arg3: memref<1x256xf32, #tpu.memory_space<vmem>>, %arg4: memref<256x256xbf16, #tpu.memory_space<vmem>>, %arg5: memref<256x128xbf16, #tpu.memory_space<vmem>>, %arg6: memref<1x128xf32, #tpu.memory_space<vmem>>, %arg7: memref<8x128xf32, #tpu.memory_space<vmem>>) attributes {dimension_semantics = [], scalar_prefetch = 0 : i64, scratch_operands = 0 : i64, tpu.core_type = #tpu.core_type<tc>} {
    %c0 = arith.constant 0 : index
    %c0_0 = arith.constant 0 : index
    %0 = vector.load %arg0[%c0, %c0_0] : memref<96x64xbf16, #tpu.memory_space<vmem>>, vector<96x64xbf16>
    %c0_1 = arith.constant 0 : index
    %c0_2 = arith.constant 0 : index
    %1 = vector.load %arg2[%c0_1, %c0_2] : memref<64x256xbf16, #tpu.memory_space<vmem>>, vector<64x256xbf16>
    %cst = arith.constant dense<0.000000e+00> : vector<96x256xf32>
    %2 = tpu.matmul %0, %1, %cst {dimension_numbers = #tpu.dot_dimension_numbers<[1], [0], [0], [1], [0, 0, 1, 1], [], []>} : vector<96x64xbf16>, vector<64x256xbf16>, vector<96x256xf32> -> vector<96x256xf32>
    %c0_3 = arith.constant 0 : index
    %c0_4 = arith.constant 0 : index
    %3 = vector.load %arg3[%c0_3, %c0_4] : memref<1x256xf32, #tpu.memory_space<vmem>>, vector<1x256xf32>
    %4 = vector.broadcast %3 : vector<1x256xf32> to vector<96x256xf32>
    %5 = arith.addf %2, %4 : vector<96x256xf32>
    %6 = arith.truncf %5 : vector<96x256xf32> to vector<96x256xbf16>
    %7 = vector.shape_cast %6 : vector<96x256xbf16> to vector<12x8x256xbf16>
    %c0_5 = arith.constant 0 : index
    %c0_6 = arith.constant 0 : index
    %8 = vector.load %arg1[%c0_5, %c0_6] : memref<8x1xi32, #tpu.memory_space<vmem>>, vector<8x1xi32>
    %9 = vector.shape_cast %8 : vector<8x1xi32> to vector<8x1xi32>
    %10 = vector.broadcast %9 : vector<8x1xi32> to vector<8x256xi32>
    %11 = tpu.iota {dimensions = array<i32: 1>} : vector<8x256xi32>
    %c128_i32 = arith.constant 128 : i32
    %12 = vector.broadcast %c128_i32 : i32 to vector<8x256xi32>
    %13 = arith.cmpi slt, %11, %12 : vector<8x256xi32>
    %c12_i32 = arith.constant 12 : i32
    %14 = vector.broadcast %c12_i32 : i32 to vector<8x256xi32>
    %15 = arith.subi %14, %10 : vector<8x256xi32>
    %c0_i32 = arith.constant 0 : i32
    %16 = vector.broadcast %c0_i32 : i32 to vector<8x256xi32>
    %17 = arith.select %13, %16, %15 : vector<8x256xi1>, vector<8x256xi32>
    %c12_i32_7 = arith.constant 12 : i32
    %18 = vector.broadcast %c12_i32_7 : i32 to vector<8x256xi32>
    %19 = arith.select %13, %10, %18 : vector<8x256xi1>, vector<8x256xi32>
    %c0_i32_8 = arith.constant 0 : i32
    %20 = vector.broadcast %c0_i32_8 : i32 to vector<8x256xi32>
    %21 = arith.cmpi sle, %17, %20 : vector<8x256xi32>
    %c0_i32_9 = arith.constant 0 : i32
    %22 = vector.broadcast %c0_i32_9 : i32 to vector<8x256xi32>
    %23 = arith.cmpi sgt, %19, %22 : vector<8x256xi32>
    %24 = arith.andi %21, %23 : vector<8x256xi1>
    %c1_i32 = arith.constant 1 : i32
    %25 = vector.broadcast %c1_i32 : i32 to vector<8x256xi32>
    %26 = arith.cmpi sle, %17, %25 : vector<8x256xi32>
    %c1_i32_10 = arith.constant 1 : i32
    %27 = vector.broadcast %c1_i32_10 : i32 to vector<8x256xi32>
    %28 = arith.cmpi sgt, %19, %27 : vector<8x256xi32>
    %29 = arith.andi %26, %28 : vector<8x256xi1>
    %c2_i32 = arith.constant 2 : i32
    %30 = vector.broadcast %c2_i32 : i32 to vector<8x256xi32>
    %31 = arith.cmpi sle, %17, %30 : vector<8x256xi32>
    %c2_i32_11 = arith.constant 2 : i32
    %32 = vector.broadcast %c2_i32_11 : i32 to vector<8x256xi32>
    %33 = arith.cmpi sgt, %19, %32 : vector<8x256xi32>
    %34 = arith.andi %31, %33 : vector<8x256xi1>
    %c3_i32 = arith.constant 3 : i32
    %35 = vector.broadcast %c3_i32 : i32 to vector<8x256xi32>
    %36 = arith.cmpi sle, %17, %35 : vector<8x256xi32>
    %c3_i32_12 = arith.constant 3 : i32
    %37 = vector.broadcast %c3_i32_12 : i32 to vector<8x256xi32>
    %38 = arith.cmpi sgt, %19, %37 : vector<8x256xi32>
    %39 = arith.andi %36, %38 : vector<8x256xi1>
    %c4_i32 = arith.constant 4 : i32
    %40 = vector.broadcast %c4_i32 : i32 to vector<8x256xi32>
    %41 = arith.cmpi sle, %17, %40 : vector<8x256xi32>
    %c4_i32_13 = arith.constant 4 : i32
    %42 = vector.broadcast %c4_i32_13 : i32 to vector<8x256xi32>
    %43 = arith.cmpi sgt, %19, %42 : vector<8x256xi32>
    %44 = arith.andi %41, %43 : vector<8x256xi1>
    %c5_i32 = arith.constant 5 : i32
    %45 = vector.broadcast %c5_i32 : i32 to vector<8x256xi32>
    %46 = arith.cmpi sle, %17, %45 : vector<8x256xi32>
    %c5_i32_14 = arith.constant 5 : i32
    %47 = vector.broadcast %c5_i32_14 : i32 to vector<8x256xi32>
    %48 = arith.cmpi sgt, %19, %47 : vector<8x256xi32>
    %49 = arith.andi %46, %48 : vector<8x256xi1>
    %c6_i32 = arith.constant 6 : i32
    %50 = vector.broadcast %c6_i32 : i32 to vector<8x256xi32>
    %51 = arith.cmpi sle, %17, %50 : vector<8x256xi32>
    %c6_i32_15 = arith.constant 6 : i32
    %52 = vector.broadcast %c6_i32_15 : i32 to vector<8x256xi32>
    %53 = arith.cmpi sgt, %19, %52 : vector<8x256xi32>
    %54 = arith.andi %51, %53 : vector<8x256xi1>
    %c7_i32 = arith.constant 7 : i32
    %55 = vector.broadcast %c7_i32 : i32 to vector<8x256xi32>
    %56 = arith.cmpi sle, %17, %55 : vector<8x256xi32>
    %c7_i32_16 = arith.constant 7 : i32
    %57 = vector.broadcast %c7_i32_16 : i32 to vector<8x256xi32>
    %58 = arith.cmpi sgt, %19, %57 : vector<8x256xi32>
    %59 = arith.andi %56, %58 : vector<8x256xi1>
    %c8_i32 = arith.constant 8 : i32
    %60 = vector.broadcast %c8_i32 : i32 to vector<8x256xi32>
    %61 = arith.cmpi sle, %17, %60 : vector<8x256xi32>
    %c8_i32_17 = arith.constant 8 : i32
    %62 = vector.broadcast %c8_i32_17 : i32 to vector<8x256xi32>
    %63 = arith.cmpi sgt, %19, %62 : vector<8x256xi32>
    %64 = arith.andi %61, %63 : vector<8x256xi1>
    %c9_i32 = arith.constant 9 : i32
    %65 = vector.broadcast %c9_i32 : i32 to vector<8x256xi32>
    %66 = arith.cmpi sle, %17, %65 : vector<8x256xi32>
    %c9_i32_18 = arith.constant 9 : i32
    %67 = vector.broadcast %c9_i32_18 : i32 to vector<8x256xi32>
    %68 = arith.cmpi sgt, %19, %67 : vector<8x256xi32>
    %69 = arith.andi %66, %68 : vector<8x256xi1>
    %c10_i32 = arith.constant 10 : i32
    %70 = vector.broadcast %c10_i32 : i32 to vector<8x256xi32>
    %71 = arith.cmpi sle, %17, %70 : vector<8x256xi32>
    %c10_i32_19 = arith.constant 10 : i32
    %72 = vector.broadcast %c10_i32_19 : i32 to vector<8x256xi32>
    %73 = arith.cmpi sgt, %19, %72 : vector<8x256xi32>
    %74 = arith.andi %71, %73 : vector<8x256xi1>
    %c11_i32 = arith.constant 11 : i32
    %75 = vector.broadcast %c11_i32 : i32 to vector<8x256xi32>
    %76 = arith.cmpi sle, %17, %75 : vector<8x256xi32>
    %c11_i32_20 = arith.constant 11 : i32
    %77 = vector.broadcast %c11_i32_20 : i32 to vector<8x256xi32>
    %78 = arith.cmpi sgt, %19, %77 : vector<8x256xi32>
    %79 = arith.andi %76, %78 : vector<8x256xi1>
    %cst_21 = arith.constant 0.000000e+00 : bf16
    %80 = vector.broadcast %cst_21 : bf16 to vector<8x256xbf16>
    %81 = vector.extract_strided_slice %7 {offsets = [0, 0, 0], sizes = [1, 8, 128], strides = [1, 1, 1]} : vector<12x8x256xbf16> to vector<1x8x128xbf16>
    %82 = vector.shape_cast %81 : vector<1x8x128xbf16> to vector<8x128xbf16>
    %83 = vector.extract_strided_slice %7 {offsets = [11, 0, 128], sizes = [1, 8, 128], strides = [1, 1, 1]} : vector<12x8x256xbf16> to vector<1x8x128xbf16>
    %84 = vector.shape_cast %83 : vector<1x8x128xbf16> to vector<8x128xbf16>
    %85 = tpu.concatenate %82, %84 in 1 : vector<8x128xbf16>, vector<8x128xbf16> -> vector<8x256xbf16>
    %c0_22 = arith.constant 0 : index
    %c0_23 = arith.constant 0 : index
    %86 = vector.load %arg4[%c0_22, %c0_23] : memref<256x256xbf16, #tpu.memory_space<vmem>>, vector<256x256xbf16>
    %cst_24 = arith.constant dense<0.000000e+00> : vector<8x256xf32>
    %87 = tpu.matmul %80, %86, %cst_24 {dimension_numbers = #tpu.dot_dimension_numbers<[1], [0], [0], [1], [0, 0, 1, 1], [], []>} : vector<8x256xbf16>, vector<256x256xbf16>, vector<8x256xf32> -> vector<8x256xf32>
    %88 = arith.truncf %87 : vector<8x256xf32> to vector<8x256xbf16>
    %89 = arith.addf %85, %88 : vector<8x256xbf16>
    %90 = math.tanh %89 : vector<8x256xbf16>
    %91 = arith.select %24, %90, %80 : vector<8x256xi1>, vector<8x256xbf16>
    %92 = vector.extract_strided_slice %7 {offsets = [1, 0, 0], sizes = [1, 8, 128], strides = [1, 1, 1]} : vector<12x8x256xbf16> to vector<1x8x128xbf16>
    %93 = vector.shape_cast %92 : vector<1x8x128xbf16> to vector<8x128xbf16>
    %94 = vector.extract_strided_slice %7 {offsets = [10, 0, 128], sizes = [1, 8, 128], strides = [1, 1, 1]} : vector<12x8x256xbf16> to vector<1x8x128xbf16>
    %95 = vector.shape_cast %94 : vector<1x8x128xbf16> to vector<8x128xbf16>
    %96 = tpu.concatenate %93, %95 in 1 : vector<8x128xbf16>, vector<8x128xbf16> -> vector<8x256xbf16>
    %c0_25 = arith.constant 0 : index
    %c0_26 = arith.constant 0 : index
    %97 = vector.load %arg4[%c0_25, %c0_26] : memref<256x256xbf16, #tpu.memory_space<vmem>>, vector<256x256xbf16>
    %cst_27 = arith.constant dense<0.000000e+00> : vector<8x256xf32>
    %98 = tpu.matmul %91, %97, %cst_27 {dimension_numbers = #tpu.dot_dimension_numbers<[1], [0], [0], [1], [0, 0, 1, 1], [], []>} : vector<8x256xbf16>, vector<256x256xbf16>, vector<8x256xf32> -> vector<8x256xf32>
    %99 = arith.truncf %98 : vector<8x256xf32> to vector<8x256xbf16>
    %100 = arith.addf %96, %99 : vector<8x256xbf16>
    %101 = math.tanh %100 : vector<8x256xbf16>
    %102 = arith.select %29, %101, %91 : vector<8x256xi1>, vector<8x256xbf16>
    %103 = vector.extract_strided_slice %7 {offsets = [2, 0, 0], sizes = [1, 8, 128], strides = [1, 1, 1]} : vector<12x8x256xbf16> to vector<1x8x128xbf16>
    %104 = vector.shape_cast %103 : vector<1x8x128xbf16> to vector<8x128xbf16>
    %105 = vector.extract_strided_slice %7 {offsets = [9, 0, 128], sizes = [1, 8, 128], strides = [1, 1, 1]} : vector<12x8x256xbf16> to vector<1x8x128xbf16>
    %106 = vector.shape_cast %105 : vector<1x8x128xbf16> to vector<8x128xbf16>
    %107 = tpu.concatenate %104, %106 in 1 : vector<8x128xbf16>, vector<8x128xbf16> -> vector<8x256xbf16>
    %c0_28 = arith.constant 0 : index
    %c0_29 = arith.constant 0 : index
    %108 = vector.load %arg4[%c0_28, %c0_29] : memref<256x256xbf16, #tpu.memory_space<vmem>>, vector<256x256xbf16>
    %cst_30 = arith.constant dense<0.000000e+00> : vector<8x256xf32>
    %109 = tpu.matmul %102, %108, %cst_30 {dimension_numbers = #tpu.dot_dimension_numbers<[1], [0], [0], [1], [0, 0, 1, 1], [], []>} : vector<8x256xbf16>, vector<256x256xbf16>, vector<8x256xf32> -> vector<8x256xf32>
    %110 = arith.truncf %109 : vector<8x256xf32> to vector<8x256xbf16>
    %111 = arith.addf %107, %110 : vector<8x256xbf16>
    %112 = math.tanh %111 : vector<8x256xbf16>
    %113 = arith.select %34, %112, %102 : vector<8x256xi1>, vector<8x256xbf16>
    %114 = vector.extract_strided_slice %7 {offsets = [3, 0, 0], sizes = [1, 8, 128], strides = [1, 1, 1]} : vector<12x8x256xbf16> to vector<1x8x128xbf16>
    %115 = vector.shape_cast %114 : vector<1x8x128xbf16> to vector<8x128xbf16>
    %116 = vector.extract_strided_slice %7 {offsets = [8, 0, 128], sizes = [1, 8, 128], strides = [1, 1, 1]} : vector<12x8x256xbf16> to vector<1x8x128xbf16>
    %117 = vector.shape_cast %116 : vector<1x8x128xbf16> to vector<8x128xbf16>
    %118 = tpu.concatenate %115, %117 in 1 : vector<8x128xbf16>, vector<8x128xbf16> -> vector<8x256xbf16>
    %c0_31 = arith.constant 0 : index
    %c0_32 = arith.constant 0 : index
    %119 = vector.load %arg4[%c0_31, %c0_32] : memref<256x256xbf16, #tpu.memory_space<vmem>>, vector<256x256xbf16>
    %cst_33 = arith.constant dense<0.000000e+00> : vector<8x256xf32>
    %120 = tpu.matmul %113, %119, %cst_33 {dimension_numbers = #tpu.dot_dimension_numbers<[1], [0], [0], [1], [0, 0, 1, 1], [], []>} : vector<8x256xbf16>, vector<256x256xbf16>, vector<8x256xf32> -> vector<8x256xf32>
    %121 = arith.truncf %120 : vector<8x256xf32> to vector<8x256xbf16>
    %122 = arith.addf %118, %121 : vector<8x256xbf16>
    %123 = math.tanh %122 : vector<8x256xbf16>
    %124 = arith.select %39, %123, %113 : vector<8x256xi1>, vector<8x256xbf16>
    %125 = vector.extract_strided_slice %7 {offsets = [4, 0, 0], sizes = [1, 8, 128], strides = [1, 1, 1]} : vector<12x8x256xbf16> to vector<1x8x128xbf16>
    %126 = vector.shape_cast %125 : vector<1x8x128xbf16> to vector<8x128xbf16>
    %127 = vector.extract_strided_slice %7 {offsets = [7, 0, 128], sizes = [1, 8, 128], strides = [1, 1, 1]} : vector<12x8x256xbf16> to vector<1x8x128xbf16>
    %128 = vector.shape_cast %127 : vector<1x8x128xbf16> to vector<8x128xbf16>
    %129 = tpu.concatenate %126, %128 in 1 : vector<8x128xbf16>, vector<8x128xbf16> -> vector<8x256xbf16>
    %c0_34 = arith.constant 0 : index
    %c0_35 = arith.constant 0 : index
    %130 = vector.load %arg4[%c0_34, %c0_35] : memref<256x256xbf16, #tpu.memory_space<vmem>>, vector<256x256xbf16>
    %cst_36 = arith.constant dense<0.000000e+00> : vector<8x256xf32>
    %131 = tpu.matmul %124, %130, %cst_36 {dimension_numbers = #tpu.dot_dimension_numbers<[1], [0], [0], [1], [0, 0, 1, 1], [], []>} : vector<8x256xbf16>, vector<256x256xbf16>, vector<8x256xf32> -> vector<8x256xf32>
    %132 = arith.truncf %131 : vector<8x256xf32> to vector<8x256xbf16>
    %133 = arith.addf %129, %132 : vector<8x256xbf16>
    %134 = math.tanh %133 : vector<8x256xbf16>
    %135 = arith.select %44, %134, %124 : vector<8x256xi1>, vector<8x256xbf16>
    %136 = vector.extract_strided_slice %7 {offsets = [5, 0, 0], sizes = [1, 8, 128], strides = [1, 1, 1]} : vector<12x8x256xbf16> to vector<1x8x128xbf16>
    %137 = vector.shape_cast %136 : vector<1x8x128xbf16> to vector<8x128xbf16>
    %138 = vector.extract_strided_slice %7 {offsets = [6, 0, 128], sizes = [1, 8, 128], strides = [1, 1, 1]} : vector<12x8x256xbf16> to vector<1x8x128xbf16>
    %139 = vector.shape_cast %138 : vector<1x8x128xbf16> to vector<8x128xbf16>
    %140 = tpu.concatenate %137, %139 in 1 : vector<8x128xbf16>, vector<8x128xbf16> -> vector<8x256xbf16>
    %c0_37 = arith.constant 0 : index
    %c0_38 = arith.constant 0 : index
    %141 = vector.load %arg4[%c0_37, %c0_38] : memref<256x256xbf16, #tpu.memory_space<vmem>>, vector<256x256xbf16>
    %cst_39 = arith.constant dense<0.000000e+00> : vector<8x256xf32>
    %142 = tpu.matmul %135, %141, %cst_39 {dimension_numbers = #tpu.dot_dimension_numbers<[1], [0], [0], [1], [0, 0, 1, 1], [], []>} : vector<8x256xbf16>, vector<256x256xbf16>, vector<8x256xf32> -> vector<8x256xf32>
    %143 = arith.truncf %142 : vector<8x256xf32> to vector<8x256xbf16>
    %144 = arith.addf %140, %143 : vector<8x256xbf16>
    %145 = math.tanh %144 : vector<8x256xbf16>
    %146 = arith.select %49, %145, %135 : vector<8x256xi1>, vector<8x256xbf16>
    %147 = vector.extract_strided_slice %7 {offsets = [6, 0, 0], sizes = [1, 8, 128], strides = [1, 1, 1]} : vector<12x8x256xbf16> to vector<1x8x128xbf16>
    %148 = vector.shape_cast %147 : vector<1x8x128xbf16> to vector<8x128xbf16>
    %149 = vector.extract_strided_slice %7 {offsets = [5, 0, 128], sizes = [1, 8, 128], strides = [1, 1, 1]} : vector<12x8x256xbf16> to vector<1x8x128xbf16>
    %150 = vector.shape_cast %149 : vector<1x8x128xbf16> to vector<8x128xbf16>
    %151 = tpu.concatenate %148, %150 in 1 : vector<8x128xbf16>, vector<8x128xbf16> -> vector<8x256xbf16>
    %c0_40 = arith.constant 0 : index
    %c0_41 = arith.constant 0 : index
    %152 = vector.load %arg4[%c0_40, %c0_41] : memref<256x256xbf16, #tpu.memory_space<vmem>>, vector<256x256xbf16>
    %cst_42 = arith.constant dense<0.000000e+00> : vector<8x256xf32>
    %153 = tpu.matmul %146, %152, %cst_42 {dimension_numbers = #tpu.dot_dimension_numbers<[1], [0], [0], [1], [0, 0, 1, 1], [], []>} : vector<8x256xbf16>, vector<256x256xbf16>, vector<8x256xf32> -> vector<8x256xf32>
    %154 = arith.truncf %153 : vector<8x256xf32> to vector<8x256xbf16>
    %155 = arith.addf %151, %154 : vector<8x256xbf16>
    %156 = math.tanh %155 : vector<8x256xbf16>
    %157 = arith.select %54, %156, %146 : vector<8x256xi1>, vector<8x256xbf16>
    %158 = vector.extract_strided_slice %7 {offsets = [7, 0, 0], sizes = [1, 8, 128], strides = [1, 1, 1]} : vector<12x8x256xbf16> to vector<1x8x128xbf16>
    %159 = vector.shape_cast %158 : vector<1x8x128xbf16> to vector<8x128xbf16>
    %160 = vector.extract_strided_slice %7 {offsets = [4, 0, 128], sizes = [1, 8, 128], strides = [1, 1, 1]} : vector<12x8x256xbf16> to vector<1x8x128xbf16>
    %161 = vector.shape_cast %160 : vector<1x8x128xbf16> to vector<8x128xbf16>
    %162 = tpu.concatenate %159, %161 in 1 : vector<8x128xbf16>, vector<8x128xbf16> -> vector<8x256xbf16>
    %c0_43 = arith.constant 0 : index
    %c0_44 = arith.constant 0 : index
    %163 = vector.load %arg4[%c0_43, %c0_44] : memref<256x256xbf16, #tpu.memory_space<vmem>>, vector<256x256xbf16>
    %cst_45 = arith.constant dense<0.000000e+00> : vector<8x256xf32>
    %164 = tpu.matmul %157, %163, %cst_45 {dimension_numbers = #tpu.dot_dimension_numbers<[1], [0], [0], [1], [0, 0, 1, 1], [], []>} : vector<8x256xbf16>, vector<256x256xbf16>, vector<8x256xf32> -> vector<8x256xf32>
    %165 = arith.truncf %164 : vector<8x256xf32> to vector<8x256xbf16>
    %166 = arith.addf %162, %165 : vector<8x256xbf16>
    %167 = math.tanh %166 : vector<8x256xbf16>
    %168 = arith.select %59, %167, %157 : vector<8x256xi1>, vector<8x256xbf16>
    %169 = vector.extract_strided_slice %7 {offsets = [8, 0, 0], sizes = [1, 8, 128], strides = [1, 1, 1]} : vector<12x8x256xbf16> to vector<1x8x128xbf16>
    %170 = vector.shape_cast %169 : vector<1x8x128xbf16> to vector<8x128xbf16>
    %171 = vector.extract_strided_slice %7 {offsets = [3, 0, 128], sizes = [1, 8, 128], strides = [1, 1, 1]} : vector<12x8x256xbf16> to vector<1x8x128xbf16>
    %172 = vector.shape_cast %171 : vector<1x8x128xbf16> to vector<8x128xbf16>
    %173 = tpu.concatenate %170, %172 in 1 : vector<8x128xbf16>, vector<8x128xbf16> -> vector<8x256xbf16>
    %c0_46 = arith.constant 0 : index
    %c0_47 = arith.constant 0 : index
    %174 = vector.load %arg4[%c0_46, %c0_47] : memref<256x256xbf16, #tpu.memory_space<vmem>>, vector<256x256xbf16>
    %cst_48 = arith.constant dense<0.000000e+00> : vector<8x256xf32>
    %175 = tpu.matmul %168, %174, %cst_48 {dimension_numbers = #tpu.dot_dimension_numbers<[1], [0], [0], [1], [0, 0, 1, 1], [], []>} : vector<8x256xbf16>, vector<256x256xbf16>, vector<8x256xf32> -> vector<8x256xf32>
    %176 = arith.truncf %175 : vector<8x256xf32> to vector<8x256xbf16>
    %177 = arith.addf %173, %176 : vector<8x256xbf16>
    %178 = math.tanh %177 : vector<8x256xbf16>
    %179 = arith.select %64, %178, %168 : vector<8x256xi1>, vector<8x256xbf16>
    %180 = vector.extract_strided_slice %7 {offsets = [9, 0, 0], sizes = [1, 8, 128], strides = [1, 1, 1]} : vector<12x8x256xbf16> to vector<1x8x128xbf16>
    %181 = vector.shape_cast %180 : vector<1x8x128xbf16> to vector<8x128xbf16>
    %182 = vector.extract_strided_slice %7 {offsets = [2, 0, 128], sizes = [1, 8, 128], strides = [1, 1, 1]} : vector<12x8x256xbf16> to vector<1x8x128xbf16>
    %183 = vector.shape_cast %182 : vector<1x8x128xbf16> to vector<8x128xbf16>
    %184 = tpu.concatenate %181, %183 in 1 : vector<8x128xbf16>, vector<8x128xbf16> -> vector<8x256xbf16>
    %c0_49 = arith.constant 0 : index
    %c0_50 = arith.constant 0 : index
    %185 = vector.load %arg4[%c0_49, %c0_50] : memref<256x256xbf16, #tpu.memory_space<vmem>>, vector<256x256xbf16>
    %cst_51 = arith.constant dense<0.000000e+00> : vector<8x256xf32>
    %186 = tpu.matmul %179, %185, %cst_51 {dimension_numbers = #tpu.dot_dimension_numbers<[1], [0], [0], [1], [0, 0, 1, 1], [], []>} : vector<8x256xbf16>, vector<256x256xbf16>, vector<8x256xf32> -> vector<8x256xf32>
    %187 = arith.truncf %186 : vector<8x256xf32> to vector<8x256xbf16>
    %188 = arith.addf %184, %187 : vector<8x256xbf16>
    %189 = math.tanh %188 : vector<8x256xbf16>
    %190 = arith.select %69, %189, %179 : vector<8x256xi1>, vector<8x256xbf16>
    %191 = vector.extract_strided_slice %7 {offsets = [10, 0, 0], sizes = [1, 8, 128], strides = [1, 1, 1]} : vector<12x8x256xbf16> to vector<1x8x128xbf16>
    %192 = vector.shape_cast %191 : vector<1x8x128xbf16> to vector<8x128xbf16>
    %193 = vector.extract_strided_slice %7 {offsets = [1, 0, 128], sizes = [1, 8, 128], strides = [1, 1, 1]} : vector<12x8x256xbf16> to vector<1x8x128xbf16>
    %194 = vector.shape_cast %193 : vector<1x8x128xbf16> to vector<8x128xbf16>
    %195 = tpu.concatenate %192, %194 in 1 : vector<8x128xbf16>, vector<8x128xbf16> -> vector<8x256xbf16>
    %c0_52 = arith.constant 0 : index
    %c0_53 = arith.constant 0 : index
    %196 = vector.load %arg4[%c0_52, %c0_53] : memref<256x256xbf16, #tpu.memory_space<vmem>>, vector<256x256xbf16>
    %cst_54 = arith.constant dense<0.000000e+00> : vector<8x256xf32>
    %197 = tpu.matmul %190, %196, %cst_54 {dimension_numbers = #tpu.dot_dimension_numbers<[1], [0], [0], [1], [0, 0, 1, 1], [], []>} : vector<8x256xbf16>, vector<256x256xbf16>, vector<8x256xf32> -> vector<8x256xf32>
    %198 = arith.truncf %197 : vector<8x256xf32> to vector<8x256xbf16>
    %199 = arith.addf %195, %198 : vector<8x256xbf16>
    %200 = math.tanh %199 : vector<8x256xbf16>
    %201 = arith.select %74, %200, %190 : vector<8x256xi1>, vector<8x256xbf16>
    %202 = vector.extract_strided_slice %7 {offsets = [11, 0, 0], sizes = [1, 8, 128], strides = [1, 1, 1]} : vector<12x8x256xbf16> to vector<1x8x128xbf16>
    %203 = vector.shape_cast %202 : vector<1x8x128xbf16> to vector<8x128xbf16>
    %204 = vector.extract_strided_slice %7 {offsets = [0, 0, 128], sizes = [1, 8, 128], strides = [1, 1, 1]} : vector<12x8x256xbf16> to vector<1x8x128xbf16>
    %205 = vector.shape_cast %204 : vector<1x8x128xbf16> to vector<8x128xbf16>
    %206 = tpu.concatenate %203, %205 in 1 : vector<8x128xbf16>, vector<8x128xbf16> -> vector<8x256xbf16>
    %c0_55 = arith.constant 0 : index
    %c0_56 = arith.constant 0 : index
    %207 = vector.load %arg4[%c0_55, %c0_56] : memref<256x256xbf16, #tpu.memory_space<vmem>>, vector<256x256xbf16>
    %cst_57 = arith.constant dense<0.000000e+00> : vector<8x256xf32>
    %208 = tpu.matmul %201, %207, %cst_57 {dimension_numbers = #tpu.dot_dimension_numbers<[1], [0], [0], [1], [0, 0, 1, 1], [], []>} : vector<8x256xbf16>, vector<256x256xbf16>, vector<8x256xf32> -> vector<8x256xf32>
    %209 = arith.truncf %208 : vector<8x256xf32> to vector<8x256xbf16>
    %210 = arith.addf %206, %209 : vector<8x256xbf16>
    %211 = math.tanh %210 : vector<8x256xbf16>
    %212 = arith.select %79, %211, %201 : vector<8x256xi1>, vector<8x256xbf16>
    %c0_58 = arith.constant 0 : index
    %c0_59 = arith.constant 0 : index
    %213 = vector.load %arg5[%c0_58, %c0_59] : memref<256x128xbf16, #tpu.memory_space<vmem>>, vector<256x128xbf16>
    %cst_60 = arith.constant dense<0.000000e+00> : vector<8x128xf32>
    %214 = tpu.matmul %212, %213, %cst_60 {dimension_numbers = #tpu.dot_dimension_numbers<[1], [0], [0], [1], [0, 0, 1, 1], [], []>} : vector<8x256xbf16>, vector<256x128xbf16>, vector<8x128xf32> -> vector<8x128xf32>
    %c0_61 = arith.constant 0 : index
    %c0_62 = arith.constant 0 : index
    %215 = vector.load %arg6[%c0_61, %c0_62] : memref<1x128xf32, #tpu.memory_space<vmem>>, vector<1x128xf32>
    %216 = vector.broadcast %215 : vector<1x128xf32> to vector<8x128xf32>
    %217 = arith.addf %214, %216 : vector<8x128xf32>
    %c0_63 = arith.constant 0 : index
    %c0_64 = arith.constant 0 : index
    %218 = vector.load %arg7[%c0_63, %c0_64] : memref<8x128xf32, #tpu.memory_space<vmem>>, vector<8x128xf32>
    tpu.vector_store %arg7[%c0_63, %c0_64], %217 {strides = array<i32>} : memref<8x128xf32, #tpu.memory_space<vmem>>, vector<8x128xf32>,
    return
  }
}

</mosaic_0001>

<llo_original>
// kernel: tpu_custom_call.1
$region0: #{tpu_custom_call.1}
  #allocation0 [shape = 'u32[]', space=smem, size = 0x4, offset = 0x4, fixed_abs, tag = 'smem constant byte address 0x4 - core index']
  #allocation1 [shape = 'u32[72,128]{1,0:T(1,128)}', space=vmem, size = 0x9000, scoped, tag = 'internal scratch']
  %s0 = inlined_call_operand.vmem [shape: bf16[96,64], index: 0, kind: input, shape index: {}]
  %s1 = inlined_call_operand.vmem [shape: s32[8,1], index: 1, kind: input, shape index: {}]
  %s2 = inlined_call_operand.vmem [shape: bf16[64,256], index: 2, kind: input, shape index: {}]
  %s3 = inlined_call_operand.vmem [shape: f32[1,256], index: 3, kind: input, shape index: {}]
  %s4 = inlined_call_operand.hbm [shape: bf16[256,256], index: 4, kind: input, shape index: {}]
  %s5 = inlined_call_operand.hbm [shape: bf16[256,128], index: 5, kind: input, shape index: {}]
  %s6 = inlined_call_operand.vmem [shape: f32[1,128], index: 6, kind: input, shape index: {}]
  %s7 = inlined_call_operand.hbm [shape: f32[8,128], index: 7, kind: output, shape index: {}]
  %s8 = sld [smem:[#allocation0]]
  $region46: #{tpu_custom_call.1} parent=0
    _
  %s10 = ssub.s32 1, %s8
  %s11 = scalar_select 0, %s10, %s8
  $region1: #{tpu_custom_call.1} parent=0
    #allocation2 [shape = 'u8[131072]{0}', space=vmem, size = 0x20000, scoped, tag = 'input window, operand 4, single buffered']
    #allocation3 [shape = 's32[1]{0}', space=sflag, size = 0x4, scoped, tag = 'scoped memory for tpu_custom_call.1']
    #allocation4 [shape = 's32[1]{0}', space=sflag, size = 0x4, scoped, tag = 'scoped memory for tpu_custom_call.1']
    #allocation5 [shape = 'u8[65536]{0}', space=vmem, size = 0x10000, scoped, tag = 'input window, operand 5, single buffered']
    #allocation6 [shape = 's32[1]{0}', space=sflag, size = 0x4, scoped, tag = 'scoped memory for tpu_custom_call.1']
    #allocation7 [shape = 'u8[4096]{0}', space=vmem, size = 0x1000, scoped, tag = 'output window, operand 0, single buffered']
    %12 = vsyncpa [#allocation3], 0
    %13 = vsyncpa [#allocation6], 0
    %14 = vsyncpa [#allocation4], 0
    // Predicated region
    $region2: #{tpu_custom_call.1} parent=1 // pred_check
      _
    $region3: #{tpu_custom_call.1} parent=1 // pred_check_branch
      %16 = sbr.rel (0) target = $region5
    $region4: #{tpu_custom_call.1} parent=1 // pred_region
      _
    $region5: #{tpu_custom_call.1} parent=1 // pred_fallthru
      _
    // Predicated region
    $region6: #{tpu_custom_call.1} parent=1 // pred_check
      _
    $region7: #{tpu_custom_call.1} parent=1 // pred_check_branch
      %18 = sbr.rel (0) target = $region9
    $region8: #{tpu_custom_call.1} parent=1 // pred_region
      _
    $region9: #{tpu_custom_call.1} parent=1 // pred_fallthru
      _
    // Predicated region
    $region10: #{tpu_custom_call.1} parent=1 // pred_check
      _
    $region11: #{tpu_custom_call.1} parent=1 // pred_check_branch
      %20 = sbr.rel (0) target = $region13
    $region12: #{tpu_custom_call.1} parent=1 // pred_region
      _
    $region13: #{tpu_custom_call.1} parent=1 // pred_fallthru
      _
    // Predicated region
    $region14: #{tpu_custom_call.1} parent=1 // pred_check
      _
    $region15: #{tpu_custom_call.1} parent=1 // pred_check_branch
      %22 = sbr.rel (0) target = $region17
    $region16: #{tpu_custom_call.1} parent=1 // pred_region
      _
    $region17: #{tpu_custom_call.1} parent=1 // pred_fallthru
      _
    // Predicated region
    $region18: #{tpu_custom_call.1} parent=1 // pred_check
      _
    $region19: #{tpu_custom_call.1} parent=1 // pred_check_branch
      %24 = sbr.rel (0) target = $region21
    $region20: #{tpu_custom_call.1} parent=1 // pred_region
      %26 = vsyncadd [#allocation3], 0
      %s27 = sshll.u32 %s4, 4
      %s28 = int_to_ptr.hbm [resolvable:$true] %s27
      %s29 = sshll.u32 [#allocation2], 4
      %s30 = int_to_ptr.vmem [resolvable:$true] %s29
      %35 = dma.hbm_to_vmem [thread:$0]  %s28, 4096, %s30, [#allocation3], 128, 128, 8
    $region21: #{tpu_custom_call.1} parent=1 // pred_fallthru
      _
    // Predicated region
    $region22: #{tpu_custom_call.1} parent=1 // pred_check
      _
    $region23: #{tpu_custom_call.1} parent=1 // pred_check_branch
      %37 = sbr.rel (0) target = $region25
    $region24: #{tpu_custom_call.1} parent=1 // pred_region
      %39 = vsyncadd [#allocation6], 0
      %s40 = sshll.u32 %s5, 4
      %s41 = int_to_ptr.hbm [resolvable:$true] %s40
      %s42 = sshll.u32 [#allocation5], 4
      %s43 = int_to_ptr.vmem [resolvable:$true] %s42
      %48 = dma.hbm_to_vmem [thread:$0]  %s41, 2048, %s43, [#allocation6], 64, 64, 4
    $region25: #{tpu_custom_call.1} parent=1 // pred_fallthru
      _
    // Predicated region
    $region26: #{tpu_custom_call.1} parent=1 // pred_check
      _
    $region27: #{tpu_custom_call.1} parent=1 // pred_check_branch
      %50 = sbr.rel (0) target = $region29
    $region28: #{tpu_custom_call.1} parent=1 // pred_region
      _
    $region29: #{tpu_custom_call.1} parent=1 // pred_fallthru
      _
    // Predicated region
    $region30: #{tpu_custom_call.1} parent=1 // pred_check
      _
    $region31: #{tpu_custom_call.1} parent=1 // pred_check_branch
      %52 = sbr.rel (0) target = $region33
    $region32: #{tpu_custom_call.1} parent=1 // pred_region
      %54 = dma.done [#allocation3], 4096
    $region33: #{tpu_custom_call.1} parent=1 // pred_fallthru
      _
    // Predicated region
    $region34: #{tpu_custom_call.1} parent=1 // pred_check
      _
    $region35: #{tpu_custom_call.1} parent=1 // pred_check_branch
      %56 = sbr.rel (0) target = $region37
    $region36: #{tpu_custom_call.1} parent=1 // pred_region
      %58 = dma.done [#allocation6], 2048
    $region37: #{tpu_custom_call.1} parent=1 // pred_fallthru
      _
    %v60 = vld [vmem:[%s0] sm:$0xf]
    %v61 = vld [vmem:[%s0 + $0x4] sm:$0xf]
    %v62 = vld [vmem:[%s0 + $0x8] sm:$0xf]
    %v63 = vld [vmem:[%s0 + $0xc] sm:$0xf]
    %v64 = vld [vmem:[%s0 + $0x10] sm:$0xf]
    %v65 = vld [vmem:[%s0 + $0x14] sm:$0xf]
    %v66 = vld [vmem:[%s0 + $0x18] sm:$0xf]
    %v67 = vld [vmem:[%s0 + $0x1c] sm:$0xf]
    %v68 = vld [vmem:[%s0 + $0x20] sm:$0xf]
    %v69 = vld [vmem:[%s0 + $0x24] sm:$0xf]
    %v70 = vld [vmem:[%s0 + $0x28] sm:$0xf]
    %v71 = vld [vmem:[%s0 + $0x2c] sm:$0xf]
    %v72 = vld [vmem:[%s2] sm:$0xff]
    %v73 = vld [vmem:[%s2 + $0x8] sm:$0xff]
    %v74 = vld [vmem:[%s2 + $0x10] sm:$0xff]
    %v75 = vld [vmem:[%s2 + $0x18] sm:$0xff]
    %v76 = vld [vmem:[%s2 + $0x20] sm:$0xff]
    %v77 = vld [vmem:[%s2 + $0x28] sm:$0xff]
    %v78 = vld [vmem:[%s2 + $0x30] sm:$0xff]
    %v79 = vld [vmem:[%s2 + $0x38] sm:$0xff]
    %v80 = vld [vmem:[%s3] sm:$0x3]
    %v82 = vperm.slane %v80, 0
    %v83 = vperm.slane %v80, 1
    %v98 = vunpack.c.l.b16 %v60
    %v99 = vunpack.c.l.b16 %v61
    %v100 = vunpack.c.l.b16 %v62
    %v101 = vunpack.c.l.b16 %v63
    %v102 = vunpack.c.l.b16 %v64
    %v103 = vunpack.c.l.b16 %v65
    %v104 = vunpack.c.l.b16 %v66
    %v105 = vunpack.c.l.b16 %v67
    %v106 = vunpack.c.l.b16 %v68
    %v107 = vunpack.c.l.b16 %v69
    %v108 = vunpack.c.l.b16 %v70
    %v109 = vunpack.c.l.b16 %v71
    %v110 = vpack.c.b16 %v99, %v98
    %v111 = vpack.c.b16 %v101, %v100
    %v112 = vpack.c.b16 %v103, %v102
    %v113 = vpack.c.b16 %v105, %v104
    %v114 = vpack.c.b16 %v107, %v106
    %v115 = vpack.c.b16 %v109, %v108
    %v124 = vunpack.c.l.b16 %v72
    %v125 = vunpack.c.h.b16 %v72
    %v126 = vunpack.c.l.b16 %v73
    %v127 = vunpack.c.h.b16 %v73
    %v128 = vunpack.c.l.b16 %v74
    %v129 = vunpack.c.h.b16 %v74
    %v130 = vunpack.c.l.b16 %v75
    %v131 = vunpack.c.h.b16 %v75
    %v132 = vunpack.c.l.b16 %v76
    %v133 = vunpack.c.h.b16 %v76
    %v134 = vunpack.c.l.b16 %v77
    %v135 = vunpack.c.h.b16 %v77
    %v136 = vunpack.c.l.b16 %v78
    %v137 = vunpack.c.h.b16 %v78
    %v138 = vunpack.c.l.b16 %v79
    %v139 = vunpack.c.h.b16 %v79
    %v140 = vpack.c.b16 %v126, %v124
    %v141 = vpack.c.b16 %v127, %v125
    %v142 = vpack.c.b16 %v130, %v128
    %v143 = vpack.c.b16 %v131, %v129
    %v144 = vpack.c.b16 %v134, %v132
    %v145 = vpack.c.b16 %v135, %v133
    %v146 = vpack.c.b16 %v138, %v136
    %v147 = vpack.c.b16 %v139, %v137
    %vm156 = vcmask 523264
    %v158 = vsel %vm156, %v110, 0
    %v161 = vsel %vm156, %v111, 0
    %v164 = vsel %vm156, %v112, 0
    %v167 = vsel %vm156, %v113, 0
    %v170 = vsel %vm156, %v114, 0
    %v173 = vsel %vm156, %v115, 0
    %175 = vmatpush.bf16.msra.mxu0 0
    %176 = vmatpush.bf16.msra.mxu0 0
    %177 = vmatpush.bf16.msra.mxu0 0
    %178 = vmatpush.bf16.msra.mxu0 0
    %179 = vmatpush.bf16.msra.mxu0 %v146
    %180 = vmatpush.bf16.msra.mxu0 %v144
    %181 = vmatpush.bf16.msra.mxu0 %v142
    %182 = vmatpush.bf16.msra.mxu0 %v140
    %183 = vmatmul.bf16.gmra.mxu0 %v158
    %v184 = vpop.f32.mrf.mxu0
    %v185 = vadd.f32 %v82, %v184
    %v186 = vpop.f32.mrf.mxu0
    %v187 = vadd.f32 %v82, %v186
    %188 = vmatmul.bf16.gmra.mxu0 %v161
    %v189 = vpop.f32.mrf.mxu0
    %v190 = vadd.f32 %v82, %v189
    %v191 = vpop.f32.mrf.mxu0
    %v192 = vadd.f32 %v82, %v191
    %193 = vmatmul.bf16.gmra.mxu0 %v164
    %v194 = vpop.f32.mrf.mxu0
    %v195 = vadd.f32 %v82, %v194
    %v196 = vpop.f32.mrf.mxu0
    %v197 = vadd.f32 %v82, %v196
    %198 = vmatmul.bf16.gmra.mxu0 %v167
    %v199 = vpop.f32.mrf.mxu0
    %v200 = vadd.f32 %v82, %v199
    %v201 = vpop.f32.mrf.mxu0
    %v202 = vadd.f32 %v82, %v201
    %203 = vmatmul.bf16.gmra.mxu0 %v170
    %v204 = vpop.f32.mrf.mxu0
    %v205 = vadd.f32 %v82, %v204
    %v206 = vpop.f32.mrf.mxu0
    %v207 = vadd.f32 %v82, %v206
    %208 = vmatmul.bf16.gmra.mxu0 %v173
    %v209 = vpop.f32.mrf.mxu0
    %v210 = vadd.f32 %v82, %v209
    %v211 = vpop.f32.mrf.mxu0
    %v212 = vadd.f32 %v82, %v211
    %213 = vdwg.mxu0
    %214 = vmatpush.bf16.msra.mxu0 0
    %215 = vmatpush.bf16.msra.mxu0 0
    %216 = vmatpush.bf16.msra.mxu0 0
    %217 = vmatpush.bf16.msra.mxu0 0
    %218 = vmatpush.bf16.msra.mxu0 %v147
    %219 = vmatpush.bf16.msra.mxu0 %v145
    %220 = vmatpush.bf16.msra.mxu0 %v143
    %221 = vmatpush.bf16.msra.mxu0 %v141
    %222 = vmatmul.bf16.gmra.mxu0 %v158
    %v223 = vpop.f32.mrf.mxu0
    %v224 = vadd.f32 %v83, %v223
    %v225 = vpop.f32.mrf.mxu0
    %v226 = vadd.f32 %v83, %v225
    %227 = vmatmul.bf16.gmra.mxu0 %v161
    %v228 = vpop.f32.mrf.mxu0
    %v229 = vadd.f32 %v83, %v228
    %v230 = vpop.f32.mrf.mxu0
    %v231 = vadd.f32 %v83, %v230
    %232 = vmatmul.bf16.gmra.mxu0 %v164
    %v233 = vpop.f32.mrf.mxu0
    %v234 = vadd.f32 %v83, %v233
    %v235 = vpop.f32.mrf.mxu0
    %v236 = vadd.f32 %v83, %v235
    %237 = vmatmul.bf16.gmra.mxu0 %v167
    %v238 = vpop.f32.mrf.mxu0
    %v239 = vadd.f32 %v83, %v238
    %v240 = vpop.f32.mrf.mxu0
    %v241 = vadd.f32 %v83, %v240
    %242 = vmatmul.bf16.gmra.mxu0 %v170
    %v243 = vpop.f32.mrf.mxu0
    %v244 = vadd.f32 %v83, %v243
    %v245 = vpop.f32.mrf.mxu0
    %v246 = vadd.f32 %v83, %v245
    %247 = vmatmul.bf16.gmra.mxu0 %v173
    %v248 = vpop.f32.mrf.mxu0
    %v249 = vadd.f32 %v83, %v248
    %v250 = vpop.f32.mrf.mxu0
    %v251 = vadd.f32 %v83, %v250
    %252 = vdwg.mxu0
    %v253 = vpack.c.bf16 %v224, %v185
    %v254 = vpack.c.bf16 %v226, %v187
    %v255 = vpack.c.bf16 %v229, %v190
    %v256 = vpack.c.bf16 %v231, %v192
    %v257 = vpack.c.bf16 %v234, %v195
    %v258 = vpack.c.bf16 %v236, %v197
    %v259 = vpack.c.bf16 %v239, %v200
    %v260 = vpack.c.bf16 %v241, %v202
    %v261 = vpack.c.bf16 %v244, %v205
    %v262 = vpack.c.bf16 %v246, %v207
    %v263 = vpack.c.bf16 %v249, %v210
    %v264 = vpack.c.bf16 %v251, %v212
    %v265 = vld [vmem:[%s1] sm:$0xff]
    %266 = vset.pattern.permute.xlu0 0
    %267 = vperm.xlu0 %266, %v265
    %v268 = vpop.permute.xlu0 %267
    %v269 = vlaneseq
    %v270 = vand.u32 %v269, 127
    %v271 = vadd.s32 %v270, 128
    %vm272 = vcmp.lt.s32.totalorder %v270, 128
    %vm273 = vcmp.lt.s32.totalorder %v271, 128
    %v274 = vsub.s32 12, %v268
    %v275 = vsel %vm272, 0, %v274
    %v276 = vsel %vm273, 0, %v274
    %v277 = vsel %vm272, %v268, 12
    %v278 = vsel %vm273, %v268, 12
    %vm279 = vcmp.le.s32.totalorder %v275, 0
    %vm280 = vcmp.le.s32.totalorder %v276, 0
    %vm281 = vcmp.gt.s32.totalorder %v277, 0
    %vm282 = vcmp.gt.s32.totalorder %v278, 0
    %vm283 = vmand %vm279, %vm281
    %vm284 = vmand %vm280, %vm282
    %vm285 = vcmp.le.s32.totalorder %v275, 1
    %vm286 = vcmp.le.s32.totalorder %v276, 1
    %vm287 = vcmp.gt.s32.totalorder %v277, 1
    %vm288 = vcmp.gt.s32.totalorder %v278, 1
    %vm289 = vmand %vm285, %vm287
    %vm290 = vmand %vm286, %vm288
    %vm291 = vcmp.le.s32.totalorder %v275, 2
    %vm292 = vcmp.le.s32.totalorder %v276, 2
    %vm293 = vcmp.gt.s32.totalorder %v277, 2
    %vm294 = vcmp.gt.s32.totalorder %v278, 2
    %vm295 = vmand %vm291, %vm293
    %vm296 = vmand %vm292, %vm294
    %vm297 = vcmp.le.s32.totalorder %v275, 3
    %vm298 = vcmp.le.s32.totalorder %v276, 3
    %vm299 = vcmp.gt.s32.totalorder %v277, 3
    %vm300 = vcmp.gt.s32.totalorder %v278, 3
    %vm301 = vmand %vm297, %vm299
    %vm302 = vmand %vm298, %vm300
    %vm303 = vcmp.le.s32.totalorder %v275, 4
    %vm304 = vcmp.le.s32.totalorder %v276, 4
    %vm305 = vcmp.gt.s32.totalorder %v277, 4
    %vm306 = vcmp.gt.s32.totalorder %v278, 4
    %vm307 = vmand %vm303, %vm305
    %vm308 = vmand %vm304, %vm306
    %vm309 = vcmp.le.s32.totalorder %v275, 5
    %vm310 = vcmp.le.s32.totalorder %v276, 5
    %vm311 = vcmp.gt.s32.totalorder %v277, 5
    %vm312 = vcmp.gt.s32.totalorder %v278, 5
    %vm313 = vmand %vm309, %vm311
    %vm314 = vmand %vm310, %vm312
    %vm315 = vcmp.le.s32.totalorder %v275, 6
    %vm316 = vcmp.le.s32.totalorder %v276, 6
    %vm317 = vcmp.gt.s32.totalorder %v277, 6
    %vm318 = vcmp.gt.s32.totalorder %v278, 6
    %vm319 = vmand %vm315, %vm317
    %vm320 = vmand %vm316, %vm318
    %vm321 = vcmp.le.s32.totalorder %v275, 7
    %vm322 = vcmp.le.s32.totalorder %v276, 7
    %vm323 = vcmp.gt.s32.totalorder %v277, 7
    %vm324 = vcmp.gt.s32.totalorder %v278, 7
    %vm325 = vmand %vm321, %vm323
    %vm326 = vmand %vm322, %vm324
    %vm327 = vcmp.le.s32.totalorder %v275, 8
    %vm328 = vcmp.le.s32.totalorder %v276, 8
    %vm329 = vcmp.gt.s32.totalorder %v277, 8
    %vm330 = vcmp.gt.s32.totalorder %v278, 8
    %vm331 = vmand %vm327, %vm329
    %vm332 = vmand %vm328, %vm330
    %vm333 = vcmp.le.s32.totalorder %v275, 9
    %vm334 = vcmp.le.s32.totalorder %v276, 9
    %vm335 = vcmp.gt.s32.totalorder %v277, 9
    %vm336 = vcmp.gt.s32.totalorder %v278, 9
    %vm337 = vmand %vm333, %vm335
    %vm338 = vmand %vm334, %vm336
    %vm339 = vcmp.le.s32.totalorder %v275, 10
    %vm340 = vcmp.le.s32.totalorder %v276, 10
    %vm341 = vcmp.gt.s32.totalorder %v277, 10
    %vm342 = vcmp.gt.s32.totalorder %v278, 10
    %vm343 = vmand %vm339, %vm341
    %vm344 = vmand %vm340, %vm342
    %vm345 = vcmp.le.s32.totalorder %v275, 11
    %vm346 = vcmp.le.s32.totalorder %v276, 11
    %vm347 = vcmp.gt.s32.totalorder %v277, 11
    %vm348 = vcmp.gt.s32.totalorder %v278, 11
    %vm349 = vmand %vm345, %vm347
    %vm350 = vmand %vm346, %vm348
    %v352 = vrot.slane %v264, 4
    %v354 = vld [vmem:[#allocation2] sm:$0xff]
    %v355 = vld [vmem:[#allocation2 + $0x8] sm:$0xff]
    %v356 = vld [vmem:[#allocation2 + $0x10] sm:$0xff]
    %v357 = vld [vmem:[#allocation2 + $0x18] sm:$0xff]
    %v358 = vld [vmem:[#allocation2 + $0x20] sm:$0xff]
    %v359 = vld [vmem:[#allocation2 + $0x28] sm:$0xff]
    %v360 = vld [vmem:[#allocation2 + $0x30] sm:$0xff]
    %v361 = vld [vmem:[#allocation2 + $0x38] sm:$0xff]
    %v362 = vld [vmem:[#allocation2 + $0x40] sm:$0xff]
    %v363 = vld [vmem:[#allocation2 + $0x48] sm:$0xff]
    %v364 = vld [vmem:[#allocation2 + $0x50] sm:$0xff]
    %v365 = vld [vmem:[#allocation2 + $0x58] sm:$0xff]
    %v366 = vld [vmem:[#allocation2 + $0x60] sm:$0xff]
    %v367 = vld [vmem:[#allocation2 + $0x68] sm:$0xff]
    %v368 = vld [vmem:[#allocation2 + $0x70] sm:$0xff]
    %v369 = vld [vmem:[#allocation2 + $0x78] sm:$0xff]
    %v370 = vld [vmem:[#allocation2 + $0x80] sm:$0xff]
    %v371 = vld [vmem:[#allocation2 + $0x88] sm:$0xff]
    %v372 = vld [vmem:[#allocation2 + $0x90] sm:$0xff]
    %v373 = vld [vmem:[#allocation2 + $0x98] sm:$0xff]
    %v374 = vld [vmem:[#allocation2 + $0xa0] sm:$0xff]
    %v375 = vld [vmem:[#allocation2 + $0xa8] sm:$0xff]
    %v376 = vld [vmem:[#allocation2 + $0xb0] sm:$0xff]
    %v377 = vld [vmem:[#allocation2 + $0xb8] sm:$0xff]
    %v378 = vld [vmem:[#allocation2 + $0xc0] sm:$0xff]
    %v379 = vld [vmem:[#allocation2 + $0xc8] sm:$0xff]
    %v380 = vld [vmem:[#allocation2 + $0xd0] sm:$0xff]
    %v381 = vld [vmem:[#allocation2 + $0xd8] sm:$0xff]
    %v382 = vld [vmem:[#allocation2 + $0xe0] sm:$0xff]
    %v383 = vld [vmem:[#allocation2 + $0xe8] sm:$0xff]
    %v384 = vld [vmem:[#allocation2 + $0xf0] sm:$0xff]
    %v385 = vld [vmem:[#allocation2 + $0xf8] sm:$0xff]
    %v418 = vunpack.c.l.b16 %v354
    %v419 = vunpack.c.h.b16 %v354
    %v420 = vunpack.c.l.b16 %v355
    %v421 = vunpack.c.h.b16 %v355
    %v422 = vunpack.c.l.b16 %v356
    %v423 = vunpack.c.h.b16 %v356
    %v424 = vunpack.c.l.b16 %v357
    %v425 = vunpack.c.h.b16 %v357
    %v426 = vunpack.c.l.b16 %v358
    %v427 = vunpack.c.h.b16 %v358
    %v428 = vunpack.c.l.b16 %v359
    %v429 = vunpack.c.h.b16 %v359
    %v430 = vunpack.c.l.b16 %v360
    %v431 = vunpack.c.h.b16 %v360
    %v432 = vunpack.c.l.b16 %v361
    %v433 = vunpack.c.h.b16 %v361
    %v434 = vunpack.c.l.b16 %v362
    %v435 = vunpack.c.h.b16 %v362
    %v436 = vunpack.c.l.b16 %v363
    %v437 = vunpack.c.h.b16 %v363
    %v438 = vunpack.c.l.b16 %v364
    %v439 = vunpack.c.h.b16 %v364
    %v440 = vunpack.c.l.b16 %v365
    %v441 = vunpack.c.h.b16 %v365
    %v442 = vunpack.c.l.b16 %v366
    %v443 = vunpack.c.h.b16 %v366
    %v444 = vunpack.c.l.b16 %v367
    %v445 = vunpack.c.h.b16 %v367
    %v446 = vunpack.c.l.b16 %v368
    %v447 = vunpack.c.h.b16 %v368
    %v448 = vunpack.c.l.b16 %v369
    %v449 = vunpack.c.h.b16 %v369
    %v450 = vunpack.c.l.b16 %v370
    %v451 = vunpack.c.h.b16 %v370
    %v452 = vunpack.c.l.b16 %v371
    %v453 = vunpack.c.h.b16 %v371
    %v454 = vunpack.c.l.b16 %v372
    %v455 = vunpack.c.h.b16 %v372
    %v456 = vunpack.c.l.b16 %v373
    %v457 = vunpack.c.h.b16 %v373
    %v458 = vunpack.c.l.b16 %v374
    %v459 = vunpack.c.h.b16 %v374
    %v460 = vunpack.c.l.b16 %v375
    %v461 = vunpack.c.h.b16 %v375
    %v462 = vunpack.c.l.b16 %v376
    %v463 = vunpack.c.h.b16 %v376
    %v464 = vunpack.c.l.b16 %v377
    %v465 = vunpack.c.h.b16 %v377
    %v466 = vunpack.c.l.b16 %v378
    %v467 = vunpack.c.h.b16 %v378
    %v468 = vunpack.c.l.b16 %v379
    %v469 = vunpack.c.h.b16 %v379
    %v470 = vunpack.c.l.b16 %v380
    %v471 = vunpack.c.h.b16 %v380
    %v472 = vunpack.c.l.b16 %v381
    %v473 = vunpack.c.h.b16 %v381
    %v474 = vunpack.c.l.b16 %v382
    %v475 = vunpack.c.h.b16 %v382
    %v476 = vunpack.c.l.b16 %v383
    %v477 = vunpack.c.h.b16 %v383
    %v478 = vunpack.c.l.b16 %v384
    %v479 = vunpack.c.h.b16 %v384
    %v480 = vunpack.c.l.b16 %v385
    %v481 = vunpack.c.h.b16 %v385
    %v482 = vpack.c.b16 %v420, %v418
    %v483 = vpack.c.b16 %v421, %v419
    %v484 = vpack.c.b16 %v424, %v422
    %v485 = vpack.c.b16 %v425, %v423
    %v486 = vpack.c.b16 %v428, %v426
    %v487 = vpack.c.b16 %v429, %v427
    %v488 = vpack.c.b16 %v432, %v430
    %v489 = vpack.c.b16 %v433, %v431
    %v490 = vpack.c.b16 %v436, %v434
    %v491 = vpack.c.b16 %v437, %v435
    %v492 = vpack.c.b16 %v440, %v438
    %v493 = vpack.c.b16 %v441, %v439
    %v494 = vpack.c.b16 %v444, %v442
    %v495 = vpack.c.b16 %v445, %v443
    %v496 = vpack.c.b16 %v448, %v446
    %v497 = vpack.c.b16 %v449, %v447
    %v498 = vpack.c.b16 %v452, %v450
    %v499 = vpack.c.b16 %v453, %v451
    %v500 = vpack.c.b16 %v456, %v454
    %v501 = vpack.c.b16 %v457, %v455
    %v502 = vpack.c.b16 %v460, %v458
    %v503 = vpack.c.b16 %v461, %v459
    %v504 = vpack.c.b16 %v464, %v462
    %v505 = vpack.c.b16 %v465, %v463
    %v506 = vpack.c.b16 %v468, %v466
    %v507 = vpack.c.b16 %v469, %v467
    %v508 = vpack.c.b16 %v472, %v470
    %v509 = vpack.c.b16 %v473, %v471
    %v510 = vpack.c.b16 %v476, %v474
    %v511 = vpack.c.b16 %v477, %v475
    %v512 = vpack.c.b16 %v480, %v478
    %v513 = vpack.c.b16 %v481, %v479
    %546 = vmatpush.bf16.msra.mxu0 %v496
    %547 = vmatpush.bf16.msra.mxu0 %v494
    %548 = vmatpush.bf16.msra.mxu0 %v492
    %549 = vmatpush.bf16.msra.mxu0 %v490
    %550 = vmatpush.bf16.msra.mxu0 %v488
    %551 = vmatpush.bf16.msra.mxu0 %v486
    %552 = vmatpush.bf16.msra.mxu0 %v484
    %553 = vmatpush.bf16.msra.mxu0 %v482
    %554 = vmatmul.bf16.gmra.mxu0 0
    %v555 = vpop.f32.mrf.mxu0
    %v556 = vadd.f32 0.0, %v555
    %v557 = vpop.f32.mrf.mxu0
    %558 = vdwg.mxu0
    %559 = vmatpush.bf16.msra.mxu0 %v512
    %560 = vmatpush.bf16.msra.mxu0 %v510
    %561 = vmatpush.bf16.msra.mxu0 %v508
    %562 = vmatpush.bf16.msra.mxu0 %v506
    %563 = vmatpush.bf16.msra.mxu0 %v504
    %564 = vmatpush.bf16.msra.mxu0 %v502
    %565 = vmatpush.bf16.msra.mxu0 %v500
    %566 = vmatpush.bf16.msra.mxu0 %v498
    %567 = vmatmul.bf16.gmra.mxu0 0
    %v568 = vpop.f32.mrf.mxu0
    %v569 = vadd.f32 %v556, %v568
    %v570 = vpop.f32.mrf.mxu0
    %571 = vdwg.mxu0
    %572 = vmatpush.bf16.msra.mxu0 %v497
    %573 = vmatpush.bf16.msra.mxu0 %v495
    %574 = vmatpush.bf16.msra.mxu0 %v493
    %575 = vmatpush.bf16.msra.mxu0 %v491
    %576 = vmatpush.bf16.msra.mxu0 %v489
    %577 = vmatpush.bf16.msra.mxu0 %v487
    %578 = vmatpush.bf16.msra.mxu0 %v485
    %579 = vmatpush.bf16.msra.mxu0 %v483
    %580 = vmatmul.bf16.gmra.mxu0 0
    %v581 = vpop.f32.mrf.mxu0
    %v582 = vadd.f32 0.0, %v581
    %v583 = vpop.f32.mrf.mxu0
    %584 = vdwg.mxu0
    %585 = vmatpush.bf16.msra.mxu0 %v513
    %586 = vmatpush.bf16.msra.mxu0 %v511
    %587 = vmatpush.bf16.msra.mxu0 %v509
    %588 = vmatpush.bf16.msra.mxu0 %v507
    %589 = vmatpush.bf16.msra.mxu0 %v505
    %590 = vmatpush.bf16.msra.mxu0 %v503
    %591 = vmatpush.bf16.msra.mxu0 %v501
    %592 = vmatpush.bf16.msra.mxu0 %v499
    %593 = vmatmul.bf16.gmra.mxu0 0
    %v594 = vpop.f32.mrf.mxu0
    %v595 = vadd.f32 %v582, %v594
    %v596 = vpop.f32.mrf.mxu0
    %597 = vdwg.mxu0
    %v598 = vpack.c.bf16 %v595, %v569
    %v599 = vunpack.c.l.bf16 %v253
    %v600 = vunpack.c.l.bf16 %v352
    %v601 = vunpack.c.l.bf16 %v598
    %v602 = vunpack.c.h.bf16 %v598
    %v603 = vadd.f32 %v599, %v601
    %v604 = vadd.f32 %v600, %v602
    %v605 = vpack.c.bf16 %v604, %v603
    %v606 = vunpack.c.l.bf16 %v605
    %v607 = vunpack.c.h.bf16 %v605
    %v608 = vtanh.pop %v606
    %v609 = vtanh.pop %v607
    %v610 = vpack.c.bf16 %v609, %v608
    %vm611 = vmpackc.low %vm284, %vm283
    %v612 = vsel %vm611, %v610, 0
    %v614 = vrot.slane %v263, 4
    %v617 = vunpack.c.l.b16 %v612
    %v618 = vunpack.c.h.b16 %v612
    %v619 = vpack.c.b16 %v617, %v617
    %v620 = vpack.c.b16 %v618, %v618
    %623 = vmatpush.bf16.msra.mxu0 %v496
    %624 = vmatpush.bf16.msra.mxu0 %v494
    %625 = vmatpush.bf16.msra.mxu0 %v492
    %626 = vmatpush.bf16.msra.mxu0 %v490
    %627 = vmatpush.bf16.msra.mxu0 %v488
    %628 = vmatpush.bf16.msra.mxu0 %v486
    %629 = vmatpush.bf16.msra.mxu0 %v484
    %630 = vmatpush.bf16.msra.mxu0 %v482
    %631 = vmatmul.bf16.gmra.mxu0 %v619
    %v632 = vpop.f32.mrf.mxu0
    %v633 = vadd.f32 0.0, %v632
    %v634 = vpop.f32.mrf.mxu0
    %635 = vdwg.mxu0
    %636 = vmatpush.bf16.msra.mxu0 %v512
    %637 = vmatpush.bf16.msra.mxu0 %v510
    %638 = vmatpush.bf16.msra.mxu0 %v508
    %639 = vmatpush.bf16.msra.mxu0 %v506
    %640 = vmatpush.bf16.msra.mxu0 %v504
    %641 = vmatpush.bf16.msra.mxu0 %v502
    %642 = vmatpush.bf16.msra.mxu0 %v500
    %643 = vmatpush.bf16.msra.mxu0 %v498
    %644 = vmatmul.bf16.gmra.mxu0 %v620
    %v645 = vpop.f32.mrf.mxu0
    %v646 = vadd.f32 %v633, %v645
    %v647 = vpop.f32.mrf.mxu0
    %648 = vdwg.mxu0
    %649 = vmatpush.bf16.msra.mxu0 %v497
    %650 = vmatpush.bf16.msra.mxu0 %v495
    %651 = vmatpush.bf16.msra.mxu0 %v493
    %652 = vmatpush.bf16.msra.mxu0 %v491
    %653 = vmatpush.bf16.msra.mxu0 %v489
    %654 = vmatpush.bf16.msra.mxu0 %v487
    %655 = vmatpush.bf16.msra.mxu0 %v485
    %656 = vmatpush.bf16.msra.mxu0 %v483
    %657 = vmatmul.bf16.gmra.mxu0 %v619
    %v658 = vpop.f32.mrf.mxu0
    %v659 = vadd.f32 0.0, %v658
    %v660 = vpop.f32.mrf.mxu0
    %661 = vdwg.mxu0
    %662 = vmatpush.bf16.msra.mxu0 %v513
    %663 = vmatpush.bf16.msra.mxu0 %v511
    %664 = vmatpush.bf16.msra.mxu0 %v509
    %665 = vmatpush.bf16.msra.mxu0 %v507
    %666 = vmatpush.bf16.msra.mxu0 %v505
    %667 = vmatpush.bf16.msra.mxu0 %v503
    %668 = vmatpush.bf16.msra.mxu0 %v501
    %669 = vmatpush.bf16.msra.mxu0 %v499
    %670 = vmatmul.bf16.gmra.mxu0 %v620
    %v671 = vpop.f32.mrf.mxu0
    %v672 = vadd.f32 %v659, %v671
    %v673 = vpop.f32.mrf.mxu0
    %674 = vdwg.mxu0
    %v675 = vpack.c.bf16 %v672, %v646
    %v676 = vunpack.c.l.bf16 %v254
    %v677 = vunpack.c.l.bf16 %v614
    %v678 = vunpack.c.l.bf16 %v675
    %v679 = vunpack.c.h.bf16 %v675
    %v680 = vadd.f32 %v676, %v678
    %v681 = vadd.f32 %v677, %v679
    %v682 = vpack.c.bf16 %v681, %v680
    %v683 = vunpack.c.l.bf16 %v682
    %v684 = vunpack.c.h.bf16 %v682
    %v685 = vtanh.pop %v683
    %v686 = vtanh.pop %v684
    %v687 = vpack.c.bf16 %v686, %v685
    %vm688 = vmpackc.low %vm290, %vm289
    %v689 = vsel %vm688, %v687, %v612
    %v691 = vrot.slane %v262, 4
    %v694 = vunpack.c.l.b16 %v689
    %v695 = vunpack.c.h.b16 %v689
    %v696 = vpack.c.b16 %v694, %v694
    %v697 = vpack.c.b16 %v695, %v695
    %700 = vmatpush.bf16.msra.mxu0 %v496
    %701 = vmatpush.bf16.msra.mxu0 %v494
    %702 = vmatpush.bf16.msra.mxu0 %v492
    %703 = vmatpush.bf16.msra.mxu0 %v490
    %704 = vmatpush.bf16.msra.mxu0 %v488
    %705 = vmatpush.bf16.msra.mxu0 %v486
    %706 = vmatpush.bf16.msra.mxu0 %v484
    %707 = vmatpush.bf16.msra.mxu0 %v482
    %708 = vmatmul.bf16.gmra.mxu0 %v696
    %v709 = vpop.f32.mrf.mxu0
    %v710 = vadd.f32 0.0, %v709
    %v711 = vpop.f32.mrf.mxu0
    %712 = vdwg.mxu0
    %713 = vmatpush.bf16.msra.mxu0 %v512
    %714 = vmatpush.bf16.msra.mxu0 %v510
    %715 = vmatpush.bf16.msra.mxu0 %v508
    %716 = vmatpush.bf16.msra.mxu0 %v506
    %717 = vmatpush.bf16.msra.mxu0 %v504
    %718 = vmatpush.bf16.msra.mxu0 %v502
    %719 = vmatpush.bf16.msra.mxu0 %v500
    %720 = vmatpush.bf16.msra.mxu0 %v498
    %721 = vmatmul.bf16.gmra.mxu0 %v697
    %v722 = vpop.f32.mrf.mxu0
    %v723 = vadd.f32 %v710, %v722
    %v724 = vpop.f32.mrf.mxu0
    %725 = vdwg.mxu0
    %726 = vmatpush.bf16.msra.mxu0 %v497
    %727 = vmatpush.bf16.msra.mxu0 %v495
    %728 = vmatpush.bf16.msra.mxu0 %v493
    %729 = vmatpush.bf16.msra.mxu0 %v491
    %730 = vmatpush.bf16.msra.mxu0 %v489
    %731 = vmatpush.bf16.msra.mxu0 %v487
    %732 = vmatpush.bf16.msra.mxu0 %v485
    %733 = vmatpush.bf16.msra.mxu0 %v483
    %734 = vmatmul.bf16.gmra.mxu0 %v696
    %v735 = vpop.f32.mrf.mxu0
    %v736 = vadd.f32 0.0, %v735
    %v737 = vpop.f32.mrf.mxu0
    %738 = vdwg.mxu0
    %739 = vmatpush.bf16.msra.mxu0 %v513
    %740 = vmatpush.bf16.msra.mxu0 %v511
    %741 = vmatpush.bf16.msra.mxu0 %v509
    %742 = vmatpush.bf16.msra.mxu0 %v507
    %743 = vmatpush.bf16.msra.mxu0 %v505
    %744 = vmatpush.bf16.msra.mxu0 %v503
    %745 = vmatpush.bf16.msra.mxu0 %v501
    %746 = vmatpush.bf16.msra.mxu0 %v499
    %747 = vmatmul.bf16.gmra.mxu0 %v697
    %v748 = vpop.f32.mrf.mxu0
    %v749 = vadd.f32 %v736, %v748
    %v750 = vpop.f32.mrf.mxu0
    %751 = vdwg.mxu0
    %v752 = vpack.c.bf16 %v749, %v723
    %v753 = vunpack.c.l.bf16 %v255
    %v754 = vunpack.c.l.bf16 %v691
    %v755 = vunpack.c.l.bf16 %v752
    %v756 = vunpack.c.h.bf16 %v752
    %v757 = vadd.f32 %v753, %v755
    %v758 = vadd.f32 %v754, %v756
    %v759 = vpack.c.bf16 %v758, %v757
    %v760 = vunpack.c.l.bf16 %v759
    %v761 = vunpack.c.h.bf16 %v759
    %v762 = vtanh.pop %v760
    %v763 = vtanh.pop %v761
    %v764 = vpack.c.bf16 %v763, %v762
    %vm765 = vmpackc.low %vm296, %vm295
    %v766 = vsel %vm765, %v764, %v689
    %v768 = vrot.slane %v261, 4
    %v771 = vunpack.c.l.b16 %v766
    %v772 = vunpack.c.h.b16 %v766
    %v773 = vpack.c.b16 %v771, %v771
    %v774 = vpack.c.b16 %v772, %v772
    %777 = vmatpush.bf16.msra.mxu0 %v496
    %778 = vmatpush.bf16.msra.mxu0 %v494
    %779 = vmatpush.bf16.msra.mxu0 %v492
    %780 = vmatpush.bf16.msra.mxu0 %v490
    %781 = vmatpush.bf16.msra.mxu0 %v488
    %782 = vmatpush.bf16.msra.mxu0 %v486
    %783 = vmatpush.bf16.msra.mxu0 %v484
    %784 = vmatpush.bf16.msra.mxu0 %v482
    %785 = vmatmul.bf16.gmra.mxu0 %v773
    %v786 = vpop.f32.mrf.mxu0
    %v787 = vadd.f32 0.0, %v786
    %v788 = vpop.f32.mrf.mxu0
    %789 = vdwg.mxu0
    %790 = vmatpush.bf16.msra.mxu0 %v512
    %791 = vmatpush.bf16.msra.mxu0 %v510
    %792 = vmatpush.bf16.msra.mxu0 %v508
    %793 = vmatpush.bf16.msra.mxu0 %v506
    %794 = vmatpush.bf16.msra.mxu0 %v504
    %795 = vmatpush.bf16.msra.mxu0 %v502
    %796 = vmatpush.bf16.msra.mxu0 %v500
    %797 = vmatpush.bf16.msra.mxu0 %v498
    %798 = vmatmul.bf16.gmra.mxu0 %v774
    %v799 = vpop.f32.mrf.mxu0
    %v800 = vadd.f32 %v787, %v799
    %v801 = vpop.f32.mrf.mxu0
    %802 = vdwg.mxu0
    %803 = vmatpush.bf16.msra.mxu0 %v497
    %804 = vmatpush.bf16.msra.mxu0 %v495
    %805 = vmatpush.bf16.msra.mxu0 %v493
    %806 = vmatpush.bf16.msra.mxu0 %v491
    %807 = vmatpush.bf16.msra.mxu0 %v489
    %808 = vmatpush.bf16.msra.mxu0 %v487
    %809 = vmatpush.bf16.msra.mxu0 %v485
    %810 = vmatpush.bf16.msra.mxu0 %v483
    %811 = vmatmul.bf16.gmra.mxu0 %v773
    %v812 = vpop.f32.mrf.mxu0
    %v813 = vadd.f32 0.0, %v812
    %v814 = vpop.f32.mrf.mxu0
    %815 = vdwg.mxu0
    %816 = vmatpush.bf16.msra.mxu0 %v513
    %817 = vmatpush.bf16.msra.mxu0 %v511
    %818 = vmatpush.bf16.msra.mxu0 %v509
    %819 = vmatpush.bf16.msra.mxu0 %v507
    %820 = vmatpush.bf16.msra.mxu0 %v505
    %821 = vmatpush.bf16.msra.mxu0 %v503
    %822 = vmatpush.bf16.msra.mxu0 %v501
    %823 = vmatpush.bf16.msra.mxu0 %v499
    %824 = vmatmul.bf16.gmra.mxu0 %v774
    %v825 = vpop.f32.mrf.mxu0
    %v826 = vadd.f32 %v813, %v825
    %v827 = vpop.f32.mrf.mxu0
    %828 = vdwg.mxu0
    %v829 = vpack.c.bf16 %v826, %v800
    %v830 = vunpack.c.l.bf16 %v256
    %v831 = vunpack.c.l.bf16 %v768
    %v832 = vunpack.c.l.bf16 %v829
    %v833 = vunpack.c.h.bf16 %v829
    %v834 = vadd.f32 %v830, %v832
    %v835 = vadd.f32 %v831, %v833
    %v836 = vpack.c.bf16 %v835, %v834
    %v837 = vunpack.c.l.bf16 %v836
    %v838 = vunpack.c.h.bf16 %v836
    %v839 = vtanh.pop %v837
    %v840 = vtanh.pop %v838
    %v841 = vpack.c.bf16 %v840, %v839
    %vm842 = vmpackc.low %vm302, %vm301
    %v843 = vsel %vm842, %v841, %v766
    %v845 = vrot.slane %v260, 4
    %v848 = vunpack.c.l.b16 %v843
    %v849 = vunpack.c.h.b16 %v843
    %v850 = vpack.c.b16 %v848, %v848
    %v851 = vpack.c.b16 %v849, %v849
    %854 = vmatpush.bf16.msra.mxu0 %v496
    %855 = vmatpush.bf16.msra.mxu0 %v494
    %856 = vmatpush.bf16.msra.mxu0 %v492
    %857 = vmatpush.bf16.msra.mxu0 %v490
    %858 = vmatpush.bf16.msra.mxu0 %v488
    %859 = vmatpush.bf16.msra.mxu0 %v486
    %860 = vmatpush.bf16.msra.mxu0 %v484
    %861 = vmatpush.bf16.msra.mxu0 %v482
    %862 = vmatmul.bf16.gmra.mxu0 %v850
    %v863 = vpop.f32.mrf.mxu0
    %v864 = vadd.f32 0.0, %v863
    %v865 = vpop.f32.mrf.mxu0
    %866 = vdwg.mxu0
    %867 = vmatpush.bf16.msra.mxu0 %v512
    %868 = vmatpush.bf16.msra.mxu0 %v510
    %869 = vmatpush.bf16.msra.mxu0 %v508
    %870 = vmatpush.bf16.msra.mxu0 %v506
    %871 = vmatpush.bf16.msra.mxu0 %v504
    %872 = vmatpush.bf16.msra.mxu0 %v502
    %873 = vmatpush.bf16.msra.mxu0 %v500
    %874 = vmatpush.bf16.msra.mxu0 %v498
    %875 = vmatmul.bf16.gmra.mxu0 %v851
    %v876 = vpop.f32.mrf.mxu0
    %v877 = vadd.f32 %v864, %v876
    %v878 = vpop.f32.mrf.mxu0
    %879 = vdwg.mxu0
    %880 = vmatpush.bf16.msra.mxu0 %v497
    %881 = vmatpush.bf16.msra.mxu0 %v495
    %882 = vmatpush.bf16.msra.mxu0 %v493
    %883 = vmatpush.bf16.msra.mxu0 %v491
    %884 = vmatpush.bf16.msra.mxu0 %v489
    %885 = vmatpush.bf16.msra.mxu0 %v487
    %886 = vmatpush.bf16.msra.mxu0 %v485
    %887 = vmatpush.bf16.msra.mxu0 %v483
    %888 = vmatmul.bf16.gmra.mxu0 %v850
    %v889 = vpop.f32.mrf.mxu0
    %v890 = vadd.f32 0.0, %v889
    %v891 = vpop.f32.mrf.mxu0
    %892 = vdwg.mxu0
    %893 = vmatpush.bf16.msra.mxu0 %v513
    %894 = vmatpush.bf16.msra.mxu0 %v511
    %895 = vmatpush.bf16.msra.mxu0 %v509
    %896 = vmatpush.bf16.msra.mxu0 %v507
    %897 = vmatpush.bf16.msra.mxu0 %v505
    %898 = vmatpush.bf16.msra.mxu0 %v503
    %899 = vmatpush.bf16.msra.mxu0 %v501
    %900 = vmatpush.bf16.msra.mxu0 %v499
    %901 = vmatmul.bf16.gmra.mxu0 %v851
    %v902 = vpop.f32.mrf.mxu0
    %v903 = vadd.f32 %v890, %v902
    %v904 = vpop.f32.mrf.mxu0
    %905 = vdwg.mxu0
    %v906 = vpack.c.bf16 %v903, %v877
    %v907 = vunpack.c.l.bf16 %v257
    %v908 = vunpack.c.l.bf16 %v845
    %v909 = vunpack.c.l.bf16 %v906
    %v910 = vunpack.c.h.bf16 %v906
    %v911 = vadd.f32 %v907, %v909
    %v912 = vadd.f32 %v908, %v910
    %v913 = vpack.c.bf16 %v912, %v911
    %v914 = vunpack.c.l.bf16 %v913
    %v915 = vunpack.c.h.bf16 %v913
    %v916 = vtanh.pop %v914
    %v917 = vtanh.pop %v915
    %v918 = vpack.c.bf16 %v917, %v916
    %vm919 = vmpackc.low %vm308, %vm307
    %v920 = vsel %vm919, %v918, %v843
    %v922 = vrot.slane %v259, 4
    %v925 = vunpack.c.l.b16 %v920
    %v926 = vunpack.c.h.b16 %v920
    %v927 = vpack.c.b16 %v925, %v925
    %v928 = vpack.c.b16 %v926, %v926
    %931 = vmatpush.bf16.msra.mxu0 %v496
    %932 = vmatpush.bf16.msra.mxu0 %v494
    %933 = vmatpush.bf16.msra.mxu0 %v492
    %934 = vmatpush.bf16.msra.mxu0 %v490
    %935 = vmatpush.bf16.msra.mxu0 %v488
    %936 = vmatpush.bf16.msra.mxu0 %v486
    %937 = vmatpush.bf16.msra.mxu0 %v484
    %938 = vmatpush.bf16.msra.mxu0 %v482
    %939 = vmatmul.bf16.gmra.mxu0 %v927
    %v940 = vpop.f32.mrf.mxu0
    %v941 = vadd.f32 0.0, %v940
    %v942 = vpop.f32.mrf.mxu0
    %943 = vdwg.mxu0
    %944 = vmatpush.bf16.msra.mxu0 %v512
    %945 = vmatpush.bf16.msra.mxu0 %v510
    %946 = vmatpush.bf16.msra.mxu0 %v508
    %947 = vmatpush.bf16.msra.mxu0 %v506
    %948 = vmatpush.bf16.msra.mxu0 %v504
    %949 = vmatpush.bf16.msra.mxu0 %v502
    %950 = vmatpush.bf16.msra.mxu0 %v500
    %951 = vmatpush.bf16.msra.mxu0 %v498
    %952 = vmatmul.bf16.gmra.mxu0 %v928
    %v953 = vpop.f32.mrf.mxu0
    %v954 = vadd.f32 %v941, %v953
    %v955 = vpop.f32.mrf.mxu0
    %956 = vdwg.mxu0
    %957 = vmatpush.bf16.msra.mxu0 %v497
    %958 = vmatpush.bf16.msra.mxu0 %v495
    %959 = vmatpush.bf16.msra.mxu0 %v493
    %960 = vmatpush.bf16.msra.mxu0 %v491
    %961 = vmatpush.bf16.msra.mxu0 %v489
    %962 = vmatpush.bf16.msra.mxu0 %v487
    %963 = vmatpush.bf16.msra.mxu0 %v485
    %964 = vmatpush.bf16.msra.mxu0 %v483
    %965 = vmatmul.bf16.gmra.mxu0 %v927
    %v966 = vpop.f32.mrf.mxu0
    %v967 = vadd.f32 0.0, %v966
    %v968 = vpop.f32.mrf.mxu0
    %969 = vdwg.mxu0
    %970 = vmatpush.bf16.msra.mxu0 %v513
    %971 = vmatpush.bf16.msra.mxu0 %v511
    %972 = vmatpush.bf16.msra.mxu0 %v509
    %973 = vmatpush.bf16.msra.mxu0 %v507
    %974 = vmatpush.bf16.msra.mxu0 %v505
    %975 = vmatpush.bf16.msra.mxu0 %v503
    %976 = vmatpush.bf16.msra.mxu0 %v501
    %977 = vmatpush.bf16.msra.mxu0 %v499
    %978 = vmatmul.bf16.gmra.mxu0 %v928
    %v979 = vpop.f32.mrf.mxu0
    %v980 = vadd.f32 %v967, %v979
    %v981 = vpop.f32.mrf.mxu0
    %982 = vdwg.mxu0
    %v983 = vpack.c.bf16 %v980, %v954
    %v984 = vunpack.c.l.bf16 %v258
    %v985 = vunpack.c.l.bf16 %v922
    %v986 = vunpack.c.l.bf16 %v983
    %v987 = vunpack.c.h.bf16 %v983
    %v988 = vadd.f32 %v984, %v986
    %v989 = vadd.f32 %v985, %v987
    %v990 = vpack.c.bf16 %v989, %v988
    %v991 = vunpack.c.l.bf16 %v990
    %v992 = vunpack.c.h.bf16 %v990
    %v993 = vtanh.pop %v991
    %v994 = vtanh.pop %v992
    %v995 = vpack.c.bf16 %v994, %v993
    %vm996 = vmpackc.low %vm314, %vm313
    %v997 = vsel %vm996, %v995, %v920
    %v999 = vrot.slane %v258, 4
    %v1002 = vunpack.c.l.b16 %v997
    %v1003 = vunpack.c.h.b16 %v997
    %v1004 = vpack.c.b16 %v1002, %v1002
    %v1005 = vpack.c.b16 %v1003, %v1003
    %1008 = vmatpush.bf16.msra.mxu0 %v496
    %1009 = vmatpush.bf16.msra.mxu0 %v494
    %1010 = vmatpush.bf16.msra.mxu0 %v492
    %1011 = vmatpush.bf16.msra.mxu0 %v490
    %1012 = vmatpush.bf16.msra.mxu0 %v488
    %1013 = vmatpush.bf16.msra.mxu0 %v486
    %1014 = vmatpush.bf16.msra.mxu0 %v484
    %1015 = vmatpush.bf16.msra.mxu0 %v482
    %1016 = vmatmul.bf16.gmra.mxu0 %v1004
    %v1017 = vpop.f32.mrf.mxu0
    %v1018 = vadd.f32 0.0, %v1017
    %v1019 = vpop.f32.mrf.mxu0
    %1020 = vdwg.mxu0
    %1021 = vmatpush.bf16.msra.mxu0 %v512
    %1022 = vmatpush.bf16.msra.mxu0 %v510
    %1023 = vmatpush.bf16.msra.mxu0 %v508
    %1024 = vmatpush.bf16.msra.mxu0 %v506
    %1025 = vmatpush.bf16.msra.mxu0 %v504
    %1026 = vmatpush.bf16.msra.mxu0 %v502
    %1027 = vmatpush.bf16.msra.mxu0 %v500
    %1028 = vmatpush.bf16.msra.mxu0 %v498
    %1029 = vmatmul.bf16.gmra.mxu0 %v1005
    %v1030 = vpop.f32.mrf.mxu0
    %v1031 = vadd.f32 %v1018, %v1030
    %v1032 = vpop.f32.mrf.mxu0
    %1033 = vdwg.mxu0
    %1034 = vmatpush.bf16.msra.mxu0 %v497
    %1035 = vmatpush.bf16.msra.mxu0 %v495
    %1036 = vmatpush.bf16.msra.mxu0 %v493
    %1037 = vmatpush.bf16.msra.mxu0 %v491
    %1038 = vmatpush.bf16.msra.mxu0 %v489
    %1039 = vmatpush.bf16.msra.mxu0 %v487
    %1040 = vmatpush.bf16.msra.mxu0 %v485
    %1041 = vmatpush.bf16.msra.mxu0 %v483
    %1042 = vmatmul.bf16.gmra.mxu0 %v1004
    %v1043 = vpop.f32.mrf.mxu0
    %v1044 = vadd.f32 0.0, %v1043
    %v1045 = vpop.f32.mrf.mxu0
    %1046 = vdwg.mxu0
    %1047 = vmatpush.bf16.msra.mxu0 %v513
    %1048 = vmatpush.bf16.msra.mxu0 %v511
    %1049 = vmatpush.bf16.msra.mxu0 %v509
    %1050 = vmatpush.bf16.msra.mxu0 %v507
    %1051 = vmatpush.bf16.msra.mxu0 %v505
    %1052 = vmatpush.bf16.msra.mxu0 %v503
    %1053 = vmatpush.bf16.msra.mxu0 %v501
    %1054 = vmatpush.bf16.msra.mxu0 %v499
    %1055 = vmatmul.bf16.gmra.mxu0 %v1005
    %v1056 = vpop.f32.mrf.mxu0
    %v1057 = vadd.f32 %v1044, %v1056
    %v1058 = vpop.f32.mrf.mxu0
    %1059 = vdwg.mxu0
    %v1060 = vpack.c.bf16 %v1057, %v1031
    %v1061 = vunpack.c.l.bf16 %v259
    %v1062 = vunpack.c.l.bf16 %v999
    %v1063 = vunpack.c.l.bf16 %v1060
    %v1064 = vunpack.c.h.bf16 %v1060
    %v1065 = vadd.f32 %v1061, %v1063
    %v1066 = vadd.f32 %v1062, %v1064
    %v1067 = vpack.c.bf16 %v1066, %v1065
    %v1068 = vunpack.c.l.bf16 %v1067
    %v1069 = vunpack.c.h.bf16 %v1067
    %v1070 = vtanh.pop %v1068
    %v1071 = vtanh.pop %v1069
    %v1072 = vpack.c.bf16 %v1071, %v1070
    %vm1073 = vmpackc.low %vm320, %vm319
    %v1074 = vsel %vm1073, %v1072, %v997
    %v1076 = vrot.slane %v257, 4
    %v1079 = vunpack.c.l.b16 %v1074
    %v1080 = vunpack.c.h.b16 %v1074
    %v1081 = vpack.c.b16 %v1079, %v1079
    %v1082 = vpack.c.b16 %v1080, %v1080
    %1085 = vmatpush.bf16.msra.mxu0 %v496
    %1086 = vmatpush.bf16.msra.mxu0 %v494
    %1087 = vmatpush.bf16.msra.mxu0 %v492
    %1088 = vmatpush.bf16.msra.mxu0 %v490
    %1089 = vmatpush.bf16.msra.mxu0 %v488
    %1090 = vmatpush.bf16.msra.mxu0 %v486
    %1091 = vmatpush.bf16.msra.mxu0 %v484
    %1092 = vmatpush.bf16.msra.mxu0 %v482
    %1093 = vmatmul.bf16.gmra.mxu0 %v1081
    %v1094 = vpop.f32.mrf.mxu0
    %v1095 = vadd.f32 0.0, %v1094
    %v1096 = vpop.f32.mrf.mxu0
    %1097 = vdwg.mxu0
    %1098 = vmatpush.bf16.msra.mxu0 %v512
    %1099 = vmatpush.bf16.msra.mxu0 %v510
    %1100 = vmatpush.bf16.msra.mxu0 %v508
    %1101 = vmatpush.bf16.msra.mxu0 %v506
    %1102 = vmatpush.bf16.msra.mxu0 %v504
    %1103 = vmatpush.bf16.msra.mxu0 %v502
    %1104 = vmatpush.bf16.msra.mxu0 %v500
    %1105 = vmatpush.bf16.msra.mxu0 %v498
    %1106 = vmatmul.bf16.gmra.mxu0 %v1082
    %v1107 = vpop.f32.mrf.mxu0
    %v1108 = vadd.f32 %v1095, %v1107
    %v1109 = vpop.f32.mrf.mxu0
    %1110 = vdwg.mxu0
    %1111 = vmatpush.bf16.msra.mxu0 %v497
    %1112 = vmatpush.bf16.msra.mxu0 %v495
    %1113 = vmatpush.bf16.msra.mxu0 %v493
    %1114 = vmatpush.bf16.msra.mxu0 %v491
    %1115 = vmatpush.bf16.msra.mxu0 %v489
    %1116 = vmatpush.bf16.msra.mxu0 %v487
    %1117 = vmatpush.bf16.msra.mxu0 %v485
    %1118 = vmatpush.bf16.msra.mxu0 %v483
    %1119 = vmatmul.bf16.gmra.mxu0 %v1081
    %v1120 = vpop.f32.mrf.mxu0
    %v1121 = vadd.f32 0.0, %v1120
    %v1122 = vpop.f32.mrf.mxu0
    %1123 = vdwg.mxu0
    %1124 = vmatpush.bf16.msra.mxu0 %v513
    %1125 = vmatpush.bf16.msra.mxu0 %v511
    %1126 = vmatpush.bf16.msra.mxu0 %v509
    %1127 = vmatpush.bf16.msra.mxu0 %v507
    %1128 = vmatpush.bf16.msra.mxu0 %v505
    %1129 = vmatpush.bf16.msra.mxu0 %v503
    %1130 = vmatpush.bf16.msra.mxu0 %v501
    %1131 = vmatpush.bf16.msra.mxu0 %v499
    %1132 = vmatmul.bf16.gmra.mxu0 %v1082
    %v1133 = vpop.f32.mrf.mxu0
    %v1134 = vadd.f32 %v1121, %v1133
    %v1135 = vpop.f32.mrf.mxu0
    %1136 = vdwg.mxu0
    %v1137 = vpack.c.bf16 %v1134, %v1108
    %v1138 = vunpack.c.l.bf16 %v260
    %v1139 = vunpack.c.l.bf16 %v1076
    %v1140 = vunpack.c.l.bf16 %v1137
    %v1141 = vunpack.c.h.bf16 %v1137
    %v1142 = vadd.f32 %v1138, %v1140
    %v1143 = vadd.f32 %v1139, %v1141
    %v1144 = vpack.c.bf16 %v1143, %v1142
    %v1145 = vunpack.c.l.bf16 %v1144
    %v1146 = vunpack.c.h.bf16 %v1144
    %v1147 = vtanh.pop %v1145
    %v1148 = vtanh.pop %v1146
    %v1149 = vpack.c.bf16 %v1148, %v1147
    %vm1150 = vmpackc.low %vm326, %vm325
    %v1151 = vsel %vm1150, %v1149, %v1074
    %v1153 = vrot.slane %v256, 4
    %v1156 = vunpack.c.l.b16 %v1151
    %v1157 = vunpack.c.h.b16 %v1151
    %v1158 = vpack.c.b16 %v1156, %v1156
    %v1159 = vpack.c.b16 %v1157, %v1157
    %1162 = vmatpush.bf16.msra.mxu0 %v496
    %1163 = vmatpush.bf16.msra.mxu0 %v494
    %1164 = vmatpush.bf16.msra.mxu0 %v492
    %1165 = vmatpush.bf16.msra.mxu0 %v490
    %1166 = vmatpush.bf16.msra.mxu0 %v488
    %1167 = vmatpush.bf16.msra.mxu0 %v486
    %1168 = vmatpush.bf16.msra.mxu0 %v484
    %1169 = vmatpush.bf16.msra.mxu0 %v482
    %1170 = vmatmul.bf16.gmra.mxu0 %v1158
    %v1171 = vpop.f32.mrf.mxu0
    %v1172 = vadd.f32 0.0, %v1171
    %v1173 = vpop.f32.mrf.mxu0
    %1174 = vdwg.mxu0
    %1175 = vmatpush.bf16.msra.mxu0 %v512
    %1176 = vmatpush.bf16.msra.mxu0 %v510
    %1177 = vmatpush.bf16.msra.mxu0 %v508
    %1178 = vmatpush.bf16.msra.mxu0 %v506
    %1179 = vmatpush.bf16.msra.mxu0 %v504
    %1180 = vmatpush.bf16.msra.mxu0 %v502
    %1181 = vmatpush.bf16.msra.mxu0 %v500
    %1182 = vmatpush.bf16.msra.mxu0 %v498
    %1183 = vmatmul.bf16.gmra.mxu0 %v1159
    %v1184 = vpop.f32.mrf.mxu0
    %v1185 = vadd.f32 %v1172, %v1184
    %v1186 = vpop.f32.mrf.mxu0
    %1187 = vdwg.mxu0
    %1188 = vmatpush.bf16.msra.mxu0 %v497
    %1189 = vmatpush.bf16.msra.mxu0 %v495
    %1190 = vmatpush.bf16.msra.mxu0 %v493
    %1191 = vmatpush.bf16.msra.mxu0 %v491
    %1192 = vmatpush.bf16.msra.mxu0 %v489
    %1193 = vmatpush.bf16.msra.mxu0 %v487
    %1194 = vmatpush.bf16.msra.mxu0 %v485
    %1195 = vmatpush.bf16.msra.mxu0 %v483
    %1196 = vmatmul.bf16.gmra.mxu0 %v1158
    %v1197 = vpop.f32.mrf.mxu0
    %v1198 = vadd.f32 0.0, %v1197
    %v1199 = vpop.f32.mrf.mxu0
    %1200 = vdwg.mxu0
    %1201 = vmatpush.bf16.msra.mxu0 %v513
    %1202 = vmatpush.bf16.msra.mxu0 %v511
    %1203 = vmatpush.bf16.msra.mxu0 %v509
    %1204 = vmatpush.bf16.msra.mxu0 %v507
    %1205 = vmatpush.bf16.msra.mxu0 %v505
    %1206 = vmatpush.bf16.msra.mxu0 %v503
    %1207 = vmatpush.bf16.msra.mxu0 %v501
    %1208 = vmatpush.bf16.msra.mxu0 %v499
    %1209 = vmatmul.bf16.gmra.mxu0 %v1159
    %v1210 = vpop.f32.mrf.mxu0
    %v1211 = vadd.f32 %v1198, %v1210
    %v1212 = vpop.f32.mrf.mxu0
    %1213 = vdwg.mxu0
    %v1214 = vpack.c.bf16 %v1211, %v1185
    %v1215 = vunpack.c.l.bf16 %v261
    %v1216 = vunpack.c.l.bf16 %v1153
    %v1217 = vunpack.c.l.bf16 %v1214
    %v1218 = vunpack.c.h.bf16 %v1214
    %v1219 = vadd.f32 %v1215, %v1217
    %v1220 = vadd.f32 %v1216, %v1218
    %v1221 = vpack.c.bf16 %v1220, %v1219
    %v1222 = vunpack.c.l.bf16 %v1221
    %v1223 = vunpack.c.h.bf16 %v1221
    %v1224 = vtanh.pop %v1222
    %v1225 = vtanh.pop %v1223
    %v1226 = vpack.c.bf16 %v1225, %v1224
    %vm1227 = vmpackc.low %vm332, %vm331
    %v1228 = vsel %vm1227, %v1226, %v1151
    %v1230 = vrot.slane %v255, 4
    %v1233 = vunpack.c.l.b16 %v1228
    %v1234 = vunpack.c.h.b16 %v1228
    %v1235 = vpack.c.b16 %v1233, %v1233
    %v1236 = vpack.c.b16 %v1234, %v1234
    %1239 = vmatpush.bf16.msra.mxu0 %v496
    %1240 = vmatpush.bf16.msra.mxu0 %v494
    %1241 = vmatpush.bf16.msra.mxu0 %v492
    %1242 = vmatpush.bf16.msra.mxu0 %v490
    %1243 = vmatpush.bf16.msra.mxu0 %v488
    %1244 = vmatpush.bf16.msra.mxu0 %v486
    %1245 = vmatpush.bf16.msra.mxu0 %v484
    %1246 = vmatpush.bf16.msra.mxu0 %v482
    %1247 = vmatmul.bf16.gmra.mxu0 %v1235
    %v1248 = vpop.f32.mrf.mxu0
    %v1249 = vadd.f32 0.0, %v1248
    %v1250 = vpop.f32.mrf.mxu0
    %1251 = vdwg.mxu0
    %1252 = vmatpush.bf16.msra.mxu0 %v512
    %1253 = vmatpush.bf16.msra.mxu0 %v510
    %1254 = vmatpush.bf16.msra.mxu0 %v508
    %1255 = vmatpush.bf16.msra.mxu0 %v506
    %1256 = vmatpush.bf16.msra.mxu0 %v504
    %1257 = vmatpush.bf16.msra.mxu0 %v502
    %1258 = vmatpush.bf16.msra.mxu0 %v500
    %1259 = vmatpush.bf16.msra.mxu0 %v498
    %1260 = vmatmul.bf16.gmra.mxu0 %v1236
    %v1261 = vpop.f32.mrf.mxu0
    %v1262 = vadd.f32 %v1249, %v1261
    %v1263 = vpop.f32.mrf.mxu0
    %1264 = vdwg.mxu0
    %1265 = vmatpush.bf16.msra.mxu0 %v497
    %1266 = vmatpush.bf16.msra.mxu0 %v495
    %1267 = vmatpush.bf16.msra.mxu0 %v493
    %1268 = vmatpush.bf16.msra.mxu0 %v491
    %1269 = vmatpush.bf16.msra.mxu0 %v489
    %1270 = vmatpush.bf16.msra.mxu0 %v487
    %1271 = vmatpush.bf16.msra.mxu0 %v485
    %1272 = vmatpush.bf16.msra.mxu0 %v483
    %1273 = vmatmul.bf16.gmra.mxu0 %v1235
    %v1274 = vpop.f32.mrf.mxu0
    %v1275 = vadd.f32 0.0, %v1274
    %v1276 = vpop.f32.mrf.mxu0
    %1277 = vdwg.mxu0
    %1278 = vmatpush.bf16.msra.mxu0 %v513
    %1279 = vmatpush.bf16.msra.mxu0 %v511
    %1280 = vmatpush.bf16.msra.mxu0 %v509
    %1281 = vmatpush.bf16.msra.mxu0 %v507
    %1282 = vmatpush.bf16.msra.mxu0 %v505
    %1283 = vmatpush.bf16.msra.mxu0 %v503
    %1284 = vmatpush.bf16.msra.mxu0 %v501
    %1285 = vmatpush.bf16.msra.mxu0 %v499
    %1286 = vmatmul.bf16.gmra.mxu0 %v1236
    %v1287 = vpop.f32.mrf.mxu0
    %v1288 = vadd.f32 %v1275, %v1287
    %v1289 = vpop.f32.mrf.mxu0
    %1290 = vdwg.mxu0
    %v1291 = vpack.c.bf16 %v1288, %v1262
    %v1292 = vunpack.c.l.bf16 %v262
    %v1293 = vunpack.c.l.bf16 %v1230
    %v1294 = vunpack.c.l.bf16 %v1291
    %v1295 = vunpack.c.h.bf16 %v1291
    %v1296 = vadd.f32 %v1292, %v1294
    %v1297 = vadd.f32 %v1293, %v1295
    %v1298 = vpack.c.bf16 %v1297, %v1296
    %v1299 = vunpack.c.l.bf16 %v1298
    %v1300 = vunpack.c.h.bf16 %v1298
    %v1301 = vtanh.pop %v1299
    %v1302 = vtanh.pop %v1300
    %v1303 = vpack.c.bf16 %v1302, %v1301
    %vm1304 = vmpackc.low %vm338, %vm337
    %v1305 = vsel %vm1304, %v1303, %v1228
    %v1307 = vrot.slane %v254, 4
    %v1310 = vunpack.c.l.b16 %v1305
    %v1311 = vunpack.c.h.b16 %v1305
    %v1312 = vpack.c.b16 %v1310, %v1310
    %v1313 = vpack.c.b16 %v1311, %v1311
    %1316 = vmatpush.bf16.msra.mxu0 %v496
    %1317 = vmatpush.bf16.msra.mxu0 %v494
    %1318 = vmatpush.bf16.msra.mxu0 %v492
    %1319 = vmatpush.bf16.msra.mxu0 %v490
    %1320 = vmatpush.bf16.msra.mxu0 %v488
    %1321 = vmatpush.bf16.msra.mxu0 %v486
    %1322 = vmatpush.bf16.msra.mxu0 %v484
    %1323 = vmatpush.bf16.msra.mxu0 %v482
    %1324 = vmatmul.bf16.gmra.mxu0 %v1312
    %v1325 = vpop.f32.mrf.mxu0
    %v1326 = vadd.f32 0.0, %v1325
    %v1327 = vpop.f32.mrf.mxu0
    %1328 = vdwg.mxu0
    %1329 = vmatpush.bf16.msra.mxu0 %v512
    %1330 = vmatpush.bf16.msra.mxu0 %v510
    %1331 = vmatpush.bf16.msra.mxu0 %v508
    %1332 = vmatpush.bf16.msra.mxu0 %v506
    %1333 = vmatpush.bf16.msra.mxu0 %v504
    %1334 = vmatpush.bf16.msra.mxu0 %v502
    %1335 = vmatpush.bf16.msra.mxu0 %v500
    %1336 = vmatpush.bf16.msra.mxu0 %v498
    %1337 = vmatmul.bf16.gmra.mxu0 %v1313
    %v1338 = vpop.f32.mrf.mxu0
    %v1339 = vadd.f32 %v1326, %v1338
    %v1340 = vpop.f32.mrf.mxu0
    %1341 = vdwg.mxu0
    %1342 = vmatpush.bf16.msra.mxu0 %v497
    %1343 = vmatpush.bf16.msra.mxu0 %v495
    %1344 = vmatpush.bf16.msra.mxu0 %v493
    %1345 = vmatpush.bf16.msra.mxu0 %v491
    %1346 = vmatpush.bf16.msra.mxu0 %v489
    %1347 = vmatpush.bf16.msra.mxu0 %v487
    %1348 = vmatpush.bf16.msra.mxu0 %v485
    %1349 = vmatpush.bf16.msra.mxu0 %v483
    %1350 = vmatmul.bf16.gmra.mxu0 %v1312
    %v1351 = vpop.f32.mrf.mxu0
    %v1352 = vadd.f32 0.0, %v1351
    %v1353 = vpop.f32.mrf.mxu0
    %1354 = vdwg.mxu0
    %1355 = vmatpush.bf16.msra.mxu0 %v513
    %1356 = vmatpush.bf16.msra.mxu0 %v511
    %1357 = vmatpush.bf16.msra.mxu0 %v509
    %1358 = vmatpush.bf16.msra.mxu0 %v507
    %1359 = vmatpush.bf16.msra.mxu0 %v505
    %1360 = vmatpush.bf16.msra.mxu0 %v503
    %1361 = vmatpush.bf16.msra.mxu0 %v501
    %1362 = vmatpush.bf16.msra.mxu0 %v499
    %1363 = vmatmul.bf16.gmra.mxu0 %v1313
    %v1364 = vpop.f32.mrf.mxu0
    %v1365 = vadd.f32 %v1352, %v1364
    %v1366 = vpop.f32.mrf.mxu0
    %1367 = vdwg.mxu0
    %v1368 = vpack.c.bf16 %v1365, %v1339
    %v1369 = vunpack.c.l.bf16 %v263
    %v1370 = vunpack.c.l.bf16 %v1307
    %v1371 = vunpack.c.l.bf16 %v1368
    %v1372 = vunpack.c.h.bf16 %v1368
    %v1373 = vadd.f32 %v1369, %v1371
    %v1374 = vadd.f32 %v1370, %v1372
    %v1375 = vpack.c.bf16 %v1374, %v1373
    %v1376 = vunpack.c.l.bf16 %v1375
    %v1377 = vunpack.c.h.bf16 %v1375
    %v1378 = vtanh.pop %v1376
    %v1379 = vtanh.pop %v1377
    %v1380 = vpack.c.bf16 %v1379, %v1378
    %vm1381 = vmpackc.low %vm344, %vm343
    %v1382 = vsel %vm1381, %v1380, %v1305
    %v1384 = vrot.slane %v253, 4
    %v1387 = vunpack.c.l.b16 %v1382
    %v1388 = vunpack.c.h.b16 %v1382
    %v1389 = vpack.c.b16 %v1387, %v1387
    %v1390 = vpack.c.b16 %v1388, %v1388
    %1393 = vmatpush.bf16.msra.mxu0 %v496
    %1394 = vmatpush.bf16.msra.mxu0 %v494
    %1395 = vmatpush.bf16.msra.mxu0 %v492
    %1396 = vmatpush.bf16.msra.mxu0 %v490
    %1397 = vmatpush.bf16.msra.mxu0 %v488
    %1398 = vmatpush.bf16.msra.mxu0 %v486
    %1399 = vmatpush.bf16.msra.mxu0 %v484
    %1400 = vmatpush.bf16.msra.mxu0 %v482
    %1401 = vmatmul.bf16.gmra.mxu0 %v1389
    %v1402 = vpop.f32.mrf.mxu0
    %v1403 = vadd.f32 0.0, %v1402
    %v1404 = vpop.f32.mrf.mxu0
    %1405 = vdwg.mxu0
    %1406 = vmatpush.bf16.msra.mxu0 %v512
    %1407 = vmatpush.bf16.msra.mxu0 %v510
    %1408 = vmatpush.bf16.msra.mxu0 %v508
    %1409 = vmatpush.bf16.msra.mxu0 %v506
    %1410 = vmatpush.bf16.msra.mxu0 %v504
    %1411 = vmatpush.bf16.msra.mxu0 %v502
    %1412 = vmatpush.bf16.msra.mxu0 %v500
    %1413 = vmatpush.bf16.msra.mxu0 %v498
    %1414 = vmatmul.bf16.gmra.mxu0 %v1390
    %v1415 = vpop.f32.mrf.mxu0
    %v1416 = vadd.f32 %v1403, %v1415
    %v1417 = vpop.f32.mrf.mxu0
    %1418 = vdwg.mxu0
    %1419 = vmatpush.bf16.msra.mxu0 %v497
    %1420 = vmatpush.bf16.msra.mxu0 %v495
    %1421 = vmatpush.bf16.msra.mxu0 %v493
    %1422 = vmatpush.bf16.msra.mxu0 %v491
    %1423 = vmatpush.bf16.msra.mxu0 %v489
    %1424 = vmatpush.bf16.msra.mxu0 %v487
    %1425 = vmatpush.bf16.msra.mxu0 %v485
    %1426 = vmatpush.bf16.msra.mxu0 %v483
    %1427 = vmatmul.bf16.gmra.mxu0 %v1389
    %v1428 = vpop.f32.mrf.mxu0
    %v1429 = vadd.f32 0.0, %v1428
    %v1430 = vpop.f32.mrf.mxu0
    %1431 = vdwg.mxu0
    %1432 = vmatpush.bf16.msra.mxu0 %v513
    %1433 = vmatpush.bf16.msra.mxu0 %v511
    %1434 = vmatpush.bf16.msra.mxu0 %v509
    %1435 = vmatpush.bf16.msra.mxu0 %v507
    %1436 = vmatpush.bf16.msra.mxu0 %v505
    %1437 = vmatpush.bf16.msra.mxu0 %v503
    %1438 = vmatpush.bf16.msra.mxu0 %v501
    %1439 = vmatpush.bf16.msra.mxu0 %v499
    %1440 = vmatmul.bf16.gmra.mxu0 %v1390
    %v1441 = vpop.f32.mrf.mxu0
    %v1442 = vadd.f32 %v1429, %v1441
    %v1443 = vpop.f32.mrf.mxu0
    %1444 = vdwg.mxu0
    %v1445 = vpack.c.bf16 %v1442, %v1416
    %v1446 = vunpack.c.l.bf16 %v264
    %v1447 = vunpack.c.l.bf16 %v1384
    %v1448 = vunpack.c.l.bf16 %v1445
    %v1449 = vunpack.c.h.bf16 %v1445
    %v1450 = vadd.f32 %v1446, %v1448
    %v1451 = vadd.f32 %v1447, %v1449
    %v1452 = vpack.c.bf16 %v1451, %v1450
    %v1453 = vunpack.c.l.bf16 %v1452
    %v1454 = vunpack.c.h.bf16 %v1452
    %v1455 = vtanh.pop %v1453
    %v1456 = vtanh.pop %v1454
    %v1457 = vpack.c.bf16 %v1456, %v1455
    %vm1458 = vmpackc.low %vm350, %vm349
    %v1459 = vsel %vm1458, %v1457, %v1382
    %v1460 = vld [vmem:[#allocation5] sm:$0xf]
    %v1461 = vld [vmem:[#allocation5 + $0x4] sm:$0xf]
    %v1462 = vld [vmem:[#allocation5 + $0x8] sm:$0xf]
    %v1463 = vld [vmem:[#allocation5 + $0xc] sm:$0xf]
    %v1464 = vld [vmem:[#allocation5 + $0x10] sm:$0xf]
    %v1465 = vld [vmem:[#allocation5 + $0x14] sm:$0xf]
    %v1466 = vld [vmem:[#allocation5 + $0x18] sm:$0xf]
    %v1467 = vld [vmem:[#allocation5 + $0x1c] sm:$0xf]
    %v1468 = vld [vmem:[#allocation5 + $0x20] sm:$0xf]
    %v1469 = vld [vmem:[#allocation5 + $0x24] sm:$0xf]
    %v1470 = vld [vmem:[#allocation5 + $0x28] sm:$0xf]
    %v1471 = vld [vmem:[#allocation5 + $0x2c] sm:$0xf]
    %v1472 = vld [vmem:[#allocation5 + $0x30] sm:$0xf]
    %v1473 = vld [vmem:[#allocation5 + $0x34] sm:$0xf]
    %v1474 = vld [vmem:[#allocation5 + $0x38] sm:$0xf]
    %v1475 = vld [vmem:[#allocation5 + $0x3c] sm:$0xf]
    %v1476 = vld [vmem:[#allocation5 + $0x40] sm:$0xf]
    %v1477 = vld [vmem:[#allocation5 + $0x44] sm:$0xf]
    %v1478 = vld [vmem:[#allocation5 + $0x48] sm:$0xf]
    %v1479 = vld [vmem:[#allocation5 + $0x4c] sm:$0xf]
    %v1480 = vld [vmem:[#allocation5 + $0x50] sm:$0xf]
    %v1481 = vld [vmem:[#allocation5 + $0x54] sm:$0xf]
    %v1482 = vld [vmem:[#allocation5 + $0x58] sm:$0xf]
    %v1483 = vld [vmem:[#allocation5 + $0x5c] sm:$0xf]
    %v1484 = vld [vmem:[#allocation5 + $0x60] sm:$0xf]
    %v1485 = vld [vmem:[#allocation5 + $0x64] sm:$0xf]
    %v1486 = vld [vmem:[#allocation5 + $0x68] sm:$0xf]
    %v1487 = vld [vmem:[#allocation5 + $0x6c] sm:$0xf]
    %v1488 = vld [vmem:[#allocation5 + $0x70] sm:$0xf]
    %v1489 = vld [vmem:[#allocation5 + $0x74] sm:$0xf]
    %v1490 = vld [vmem:[#allocation5 + $0x78] sm:$0xf]
    %v1491 = vld [vmem:[#allocation5 + $0x7c] sm:$0xf]
    %v1492 = vld [vmem:[%s6] sm:$0x1]
    %v1494 = vperm.slane %v1492, 0
    %v1497 = vunpack.c.l.b16 %v1459
    %v1498 = vunpack.c.h.b16 %v1459
    %v1499 = vpack.c.b16 %v1497, %v1497
    %v1500 = vpack.c.b16 %v1498, %v1498
    %v1535 = vunpack.c.l.b16 %v1460
    %v1536 = vunpack.c.l.b16 %v1461
    %v1537 = vunpack.c.l.b16 %v1462
    %v1538 = vunpack.c.l.b16 %v1463
    %v1539 = vunpack.c.l.b16 %v1464
    %v1540 = vunpack.c.l.b16 %v1465
    %v1541 = vunpack.c.l.b16 %v1466
    %v1542 = vunpack.c.l.b16 %v1467
    %v1543 = vunpack.c.l.b16 %v1468
    %v1544 = vunpack.c.l.b16 %v1469
    %v1545 = vunpack.c.l.b16 %v1470
    %v1546 = vunpack.c.l.b16 %v1471
    %v1547 = vunpack.c.l.b16 %v1472
    %v1548 = vunpack.c.l.b16 %v1473
    %v1549 = vunpack.c.l.b16 %v1474
    %v1550 = vunpack.c.l.b16 %v1475
    %v1551 = vunpack.c.l.b16 %v1476
    %v1552 = vunpack.c.l.b16 %v1477
    %v1553 = vunpack.c.l.b16 %v1478
    %v1554 = vunpack.c.l.b16 %v1479
    %v1555 = vunpack.c.l.b16 %v1480
    %v1556 = vunpack.c.l.b16 %v1481
    %v1557 = vunpack.c.l.b16 %v1482
    %v1558 = vunpack.c.l.b16 %v1483
    %v1559 = vunpack.c.l.b16 %v1484
    %v1560 = vunpack.c.l.b16 %v1485
    %v1561 = vunpack.c.l.b16 %v1486
    %v1562 = vunpack.c.l.b16 %v1487
    %v1563 = vunpack.c.l.b16 %v1488
    %v1564 = vunpack.c.l.b16 %v1489
    %v1565 = vunpack.c.l.b16 %v1490
    %v1566 = vunpack.c.l.b16 %v1491
    %v1567 = vpack.c.b16 %v1536, %v1535
    %v1568 = vpack.c.b16 %v1538, %v1537
    %v1569 = vpack.c.b16 %v1540, %v1539
    %v1570 = vpack.c.b16 %v1542, %v1541
    %v1571 = vpack.c.b16 %v1544, %v1543
    %v1572 = vpack.c.b16 %v1546, %v1545
    %v1573 = vpack.c.b16 %v1548, %v1547
    %v1574 = vpack.c.b16 %v1550, %v1549
    %v1575 = vpack.c.b16 %v1552, %v1551
    %v1576 = vpack.c.b16 %v1554, %v1553
    %v1577 = vpack.c.b16 %v1556, %v1555
    %v1578 = vpack.c.b16 %v1558, %v1557
    %v1579 = vpack.c.b16 %v1560, %v1559
    %v1580 = vpack.c.b16 %v1562, %v1561
    %v1581 = vpack.c.b16 %v1564, %v1563
    %v1582 = vpack.c.b16 %v1566, %v1565
    %1599 = vmatpush.bf16.msra.mxu0 %v1574
    %1600 = vmatpush.bf16.msra.mxu0 %v1573
    %1601 = vmatpush.bf16.msra.mxu0 %v1572
    %1602 = vmatpush.bf16.msra.mxu0 %v1571
    %1603 = vmatpush.bf16.msra.mxu0 %v1570
    %1604 = vmatpush.bf16.msra.mxu0 %v1569
    %1605 = vmatpush.bf16.msra.mxu0 %v1568
    %1606 = vmatpush.bf16.msra.mxu0 %v1567
    %1607 = vmatmul.bf16.gmra.mxu0 %v1499
    %v1608 = vpop.f32.mrf.mxu0
    %v1609 = vadd.f32 %v1494, %v1608
    %v1610 = vpop.f32.mrf.mxu0
    %1611 = vdwg.mxu0
    %1612 = vmatpush.bf16.msra.mxu0 %v1582
    %1613 = vmatpush.bf16.msra.mxu0 %v1581
    %1614 = vmatpush.bf16.msra.mxu0 %v1580
    %1615 = vmatpush.bf16.msra.mxu0 %v1579
    %1616 = vmatpush.bf16.msra.mxu0 %v1578
    %1617 = vmatpush.bf16.msra.mxu0 %v1577
    %1618 = vmatpush.bf16.msra.mxu0 %v1576
    %1619 = vmatpush.bf16.msra.mxu0 %v1575
    %1620 = vmatmul.bf16.gmra.mxu0 %v1500
    %v1621 = vpop.f32.mrf.mxu0
    %v1622 = vadd.f32 %v1609, %v1621
    %v1623 = vpop.f32.mrf.mxu0
    %1624 = vdwg.mxu0
    %1625 = vst [vmem:[#allocation7] sm:$0xff] %v1622
    // Predicated region
    $region38: #{tpu_custom_call.1} parent=1 // pred_check
      _
    $region39: #{tpu_custom_call.1} parent=1 // pred_check_branch
      %1627 = sbr.rel (0) target = $region41
    $region40: #{tpu_custom_call.1} parent=1 // pred_region
      %1629 = vsyncadd [#allocation4], 0
      %s1631 = sshll.u32 [#allocation7], 4
      %s1632 = int_to_ptr.vmem [resolvable:$true] %s1631
      %s1633 = sshll.u32 %s7, 4
      %s1634 = int_to_ptr.hbm [resolvable:$true] %s1633
      %1636 = dma.vmem_to_hbm [thread:$0]  %s1632, 128, %s1634, [#allocation4]
    $region41: #{tpu_custom_call.1} parent=1 // pred_fallthru
      _
    // Predicated region
    $region42: #{tpu_custom_call.1} parent=1 // pred_check
      _
    $region43: #{tpu_custom_call.1} parent=1 // pred_check_branch
      %1638 = sbr.rel (0) target = $region45
    $region44: #{tpu_custom_call.1} parent=1 // pred_region
      %1640 = dma.done [#allocation4], 128
    $region45: #{tpu_custom_call.1} parent=1 // pred_fallthru
      _
    %1641 = vsyncpa [#allocation3], 1
    %1642 = vsyncpa [#allocation6], 1
    %1643 = vsyncpa [#allocation4], 1

</llo_original>
